<compile_context>
chip_gen: v7x
topology: tpu7x:2x2x1
jax: 0.10.0
libtpu: 0.0.40
codegen_flags: <defaults>
</compile_context>

<pallas_src>
import functools

import jax
import jax.numpy as jnp
from jax import lax
from jax.experimental import pallas as pl
from jax.experimental.pallas import tpu as pltpu


def _make_kernel(n_layers, Bb, T, I, H, O_pad):
    """Ref order: xT, (wih_l, whh_l, b_l)*n_layers, fc_w, fc_b, out, hidden, seq_scratch."""

    def kernel(*refs):
        idx = 0
        x_ref = refs[idx]; idx += 1
        layer_refs = []
        for _ in range(n_layers):
            layer_refs.append((refs[idx], refs[idx + 1], refs[idx + 2]))
            idx += 3
        fcw_ref = refs[idx]; fcb_ref = refs[idx + 1]; idx += 2
        out_ref = refs[idx]; hid_ref = refs[idx + 1]; seq_ref = refs[idx + 2]

        unroll = T <= 32  # short fixed trip counts: give the LLO scheduler visibility

        for l in range(n_layers):
            wih_ref, whh_ref, b_ref = layer_refs[l]
            wih = wih_ref[...]                         # (in_dim, H) bf16
            whh = whh_ref[...]                         # (H, H)      bf16
            b = b_ref[...]                             # (1, H)      f32 (= b_ih + b_hh)

            # --- Hoisted input projection: one MXU matmul over all timesteps. ---
            if l == 0:
                xin = x_ref[...].astype(jnp.float32).reshape(T * Bb, I)
            else:
                xin = seq_ref[...].reshape(T * Bb, H)
            xp = jnp.dot(xin.astype(jnp.bfloat16), wih,
                         preferred_element_type=jnp.float32) + b       # (T*Bb, H) f32
            seq_ref[...] = xp.reshape(T, Bb, H)

            # --- Serial recurrence: only h @ W_hh and tanh on the critical path. ---
            def step(t, h):
                pre = seq_ref[t] + jnp.dot(h.astype(jnp.bfloat16), whh,
                                           preferred_element_type=jnp.float32)
                h_new = jnp.tanh(pre)                   # f32 elementwise path (v5e-safe)
                seq_ref[t] = h_new                      # overwrite pre-act with output
                return h_new

            h_last = lax.fori_loop(0, T, step, jnp.zeros((Bb, H), jnp.float32),
                                   unroll=unroll)
            hid_ref[l] = h_last.astype(hid_ref.dtype)

        # --- FC head over the whole sequence: single lane-dense (O_pad) matmul. ---
        seq = seq_ref[...].reshape(T * Bb, H)
        logits = jnp.dot(seq.astype(jnp.bfloat16), fcw_ref[...],
                         preferred_element_type=jnp.float32) + fcb_ref[...]
        out_ref[...] = logits.reshape(T, Bb, O_pad).astype(out_ref.dtype)

    return kernel


def _pick_batch_block(B):
    for cand in (128, 64, 32, 16, 8):
        if B % cand == 0:
            return cand
    return B  # small / odd batches: single block spanning the whole batch


def init_params(key, input_size, output_size, hidden_dim, n_layers):
    """Deterministic parameter init (uniform, PyTorch-like scale)."""
    params = {"layers": []}
    k = 1.0 / jnp.sqrt(hidden_dim)
    keys = jax.random.split(key, 4 * n_layers + 2)
    ki = 0
    for l in range(n_layers):
        in_dim = input_size if l == 0 else hidden_dim
        w_ih = jax.random.uniform(keys[ki], (hidden_dim, in_dim), jnp.float32, -k, k); ki += 1
        w_hh = jax.random.uniform(keys[ki], (hidden_dim, hidden_dim), jnp.float32, -k, k); ki += 1
        b_ih = jax.random.uniform(keys[ki], (hidden_dim,), jnp.float32, -k, k); ki += 1
        b_hh = jax.random.uniform(keys[ki], (hidden_dim,), jnp.float32, -k, k); ki += 1
        params["layers"].append({"w_ih": w_ih, "w_hh": w_hh, "b_ih": b_ih, "b_hh": b_hh})
    kf = 1.0 / jnp.sqrt(hidden_dim)
    params["fc_w"] = jax.random.uniform(keys[ki], (output_size, hidden_dim), jnp.float32, -kf, kf); ki += 1
    params["fc_b"] = jax.random.uniform(keys[ki], (output_size,), jnp.float32, -kf, kf)
    return params


def flatten_params_for_kernel(params, lane=128):
    """Pre-transpose, pre-cast MXU operands to bf16, fuse biases, pad FC to lane-dense."""
    flat = []
    for lp in params["layers"]:
        flat.append(lp["w_ih"].T.astype(jnp.bfloat16))                       # (in_dim, H)
        flat.append(lp["w_hh"].T.astype(jnp.bfloat16))                       # (H, H)
        flat.append((lp["b_ih"] + lp["b_hh"]).reshape(1, -1).astype(jnp.float32))  # (1, H)
    fc_w = params["fc_w"]                                                    # (O, H)
    fc_b = params["fc_b"]                                                    # (O,)
    O, H = fc_w.shape
    O_pad = ((O + lane - 1) // lane) * lane
    fc_w_p = jnp.zeros((H, O_pad), jnp.bfloat16).at[:, :O].set(fc_w.T.astype(jnp.bfloat16))
    fc_b_p = jnp.zeros((1, O_pad), jnp.float32).at[0, :O].set(fc_b)
    flat += [fc_w_p, fc_b_p]
    return tuple(flat)


@functools.partial(jax.jit, static_argnums=(2,))
def model_forward(x, flat_params, dims):
    """Pallas forward. flat_params is a tuple of arrays in kernel ref order."""
    n_layers, H, O = dims
    B, T, I = x.shape
    O_pad = flat_params[-1].shape[-1]
    Bb = _pick_batch_block(B)

    # Time-major inside the kernel so per-timestep scratch indexing is on the first axis.
    xT = jnp.swapaxes(x.astype(jnp.float32), 0, 1)                 # (T, B, I)

    kernel = _make_kernel(n_layers, Bb, T, I, H, O_pad)

    in_specs = [pl.BlockSpec((T, Bb, I), lambda b: (0, b, 0))]
    for l in range(n_layers):
        in_dim = I if l == 0 else H
        in_specs += [pl.BlockSpec((in_dim, H), lambda b: (0, 0)),
                     pl.BlockSpec((H, H), lambda b: (0, 0)),
                     pl.BlockSpec((1, H), lambda b: (0, 0))]
    in_specs += [pl.BlockSpec((H, O_pad), lambda b: (0, 0)),
                 pl.BlockSpec((1, O_pad), lambda b: (0, 0))]
    out_specs = (pl.BlockSpec((T, Bb, O_pad), lambda b: (0, b, 0)),
                 pl.BlockSpec((n_layers, Bb, H), lambda b: (0, b, 0)))

    # Advisory cost estimate for XLA scheduling around the custom call.
    flops = 0
    for l in range(n_layers):
        in_dim = I if l == 0 else H
        flops += 2 * B * T * H * (in_dim + H)
    flops += 2 * B * T * H * O_pad
    transcendentals = n_layers * B * T * H
    bytes_accessed = xT.size * xT.dtype.itemsize
    for p in flat_params:
        bytes_accessed += p.size * p.dtype.itemsize
    bytes_accessed += T * B * O_pad * 4 + n_layers * B * H * 4

    out_t, hidden = pl.pallas_call(
        kernel,
        out_shape=(jax.ShapeDtypeStruct((T, B, O_pad), jnp.float32),
                   jax.ShapeDtypeStruct((n_layers, B, H), jnp.float32)),
        grid=(B // Bb,),
        in_specs=in_specs,
        out_specs=out_specs,
        scratch_shapes=[pltpu.VMEM((T, Bb, H), jnp.float32)],
        compiler_params=pltpu.CompilerParams(dimension_semantics=("parallel",)),
        cost_estimate=pl.CostEstimate(flops=int(flops),
                                      transcendentals=int(transcendentals),
                                      bytes_accessed=int(bytes_accessed)),
    )(xT, *flat_params)

    # Batch-major flatten (matches torch out.contiguous().view(-1, H) row order),
    # then slice off the lane padding of the FC head.  Both are cheap XLA ops.
    out = jnp.swapaxes(out_t, 0, 1).reshape(B * T, O_pad)[:, :O]
    return out, hidden


def reference_forward(x, params):
    """Pure-JAX f32 reference replicating torch nn.RNN(tanh, batch_first) + Linear."""
    B, T, _ = x.shape
    n_layers = len(params["layers"])
    H = params["layers"][0]["w_hh"].shape[0]
    layer_in = x.astype(jnp.float32)
    hiddens = []
    for l in range(n_layers):
        lp = params["layers"][l]
        h = jnp.zeros((B, H), jnp.float32)
        outs = []
        for t in range(T):
            h = jnp.tanh(layer_in[:, t, :] @ lp["w_ih"].T + lp["b_ih"]
                         + h @ lp["w_hh"].T + lp["b_hh"])
            outs.append(h)
        layer_in = jnp.stack(outs, axis=1)
        hiddens.append(h)
    out = layer_in.reshape(B * T, H) @ params["fc_w"].T + params["fc_b"]
    return out, jnp.stack(hiddens, axis=0)


if __name__ == "__main__":
    # Small shapes consistent with a char-level RNN.
    batch, seq = 2, 8
    input_size = 16      # one-hot char vocab size
    hidden_dim = 32
    output_size = 16     # next-char logits over vocab
    n_layers = 2

    key = jax.random.PRNGKey(0)
    kx, kp = jax.random.split(key)

    # One-hot character inputs (deterministic).  The module interface is a dense
    # (B, T, I) tensor, so the one-hot->gather trick is intentionally not applied.
    char_ids = jax.random.randint(kx, (batch, seq), 0, input_size)
    x = jax.nn.one_hot(char_ids, input_size, dtype=jnp.float32)     # (B, T, I)

    params = init_params(kp, input_size, output_size, hidden_dim, n_layers)
    flat_params = flatten_params_for_kernel(params)

    out, hidden = model_forward(x, flat_params, (n_layers, hidden_dim, output_size))
    out = jax.block_until_ready(out)
    hidden = jax.block_until_ready(hidden)

    # Sanity check against the pure-JAX f32 reference (kernel uses bf16 MXU operands,
    # so compare with a loose tolerance).
    ref_out, ref_hidden = reference_forward(x, params)
    assert out.shape == (batch * seq, output_size)
    assert hidden.shape == (n_layers, batch, hidden_dim)
    assert jnp.allclose(out, ref_out, atol=5e-2, rtol=5e-2)
    assert jnp.allclose(hidden, ref_hidden, atol=5e-2, rtol=5e-2)

    print("KERNEL_OK")
</pallas_src>

<mosaic_0001>
module attributes {stable_mosaic.version = 11 : i64} {
  func.func @kernel(%arg0: i32, %arg1: memref<8x2x16xf32, #tpu.memory_space<vmem>>, %arg2: memref<16x32xbf16, #tpu.memory_space<vmem>>, %arg3: memref<32x32xbf16, #tpu.memory_space<vmem>>, %arg4: memref<1x32xf32, #tpu.memory_space<vmem>>, %arg5: memref<32x32xbf16, #tpu.memory_space<vmem>>, %arg6: memref<32x32xbf16, #tpu.memory_space<vmem>>, %arg7: memref<1x32xf32, #tpu.memory_space<vmem>>, %arg8: memref<32x128xbf16, #tpu.memory_space<vmem>>, %arg9: memref<1x128xf32, #tpu.memory_space<vmem>>, %arg10: memref<8x2x128xf32, #tpu.memory_space<vmem>>, %arg11: memref<2x2x32xf32, #tpu.memory_space<vmem>>, %arg12: memref<8x2x32xf32, #tpu.memory_space<vmem>>) attributes {dimension_semantics = [#tpu.dimension_semantics<parallel>], iteration_bounds = array<i64: 1>, scalar_prefetch = 0 : i64, scratch_operands = 1 : i64, tpu.core_type = #tpu.core_type<tc>, window_params = [{transform_indices = @transform_0, window_bounds = array<i64: 8, 2, 16>}, {pipeline_mode = #tpu.pipeline_mode<synchronous>, transform_indices = @transform_1, window_bounds = array<i64: 16, 32>}, {pipeline_mode = #tpu.pipeline_mode<synchronous>, transform_indices = @transform_2, window_bounds = array<i64: 32, 32>}, {pipeline_mode = #tpu.pipeline_mode<synchronous>, transform_indices = @transform_3, window_bounds = array<i64: 1, 32>}, {pipeline_mode = #tpu.pipeline_mode<synchronous>, transform_indices = @transform_4, window_bounds = array<i64: 32, 32>}, {pipeline_mode = #tpu.pipeline_mode<synchronous>, transform_indices = @transform_5, window_bounds = array<i64: 32, 32>}, {pipeline_mode = #tpu.pipeline_mode<synchronous>, transform_indices = @transform_6, window_bounds = array<i64: 1, 32>}, {pipeline_mode = #tpu.pipeline_mode<synchronous>, transform_indices = @transform_7, window_bounds = array<i64: 32, 128>}, {pipeline_mode = #tpu.pipeline_mode<synchronous>, transform_indices = @transform_8, window_bounds = array<i64: 1, 128>}, {transform_indices = @transform_9, window_bounds = array<i64: 8, 2, 128>}, {transform_indices = @transform_10, window_bounds = array<i64: 2, 2, 32>}]} {
    %c0 = arith.constant 0 : index
    %c0_0 = arith.constant 0 : index
    %0 = vector.load %arg2[%c0, %c0_0] : memref<16x32xbf16, #tpu.memory_space<vmem>>, vector<16x32xbf16>
    %c0_1 = arith.constant 0 : index
    %c0_2 = arith.constant 0 : index
    %1 = vector.load %arg3[%c0_1, %c0_2] : memref<32x32xbf16, #tpu.memory_space<vmem>>, vector<32x32xbf16>
    %c0_3 = arith.constant 0 : index
    %c0_4 = arith.constant 0 : index
    %2 = vector.load %arg4[%c0_3, %c0_4] : memref<1x32xf32, #tpu.memory_space<vmem>>, vector<1x32xf32>
    %c0_5 = arith.constant 0 : index
    %c0_6 = arith.constant 0 : index
    %c0_7 = arith.constant 0 : index
    %3 = vector.load %arg1[%c0_5, %c0_6, %c0_7] : memref<8x2x16xf32, #tpu.memory_space<vmem>>, vector<8x2x16xf32>
    %4 = vector.shape_cast %3 : vector<8x2x16xf32> to vector<16x16xf32>
    %5 = arith.truncf %4 : vector<16x16xf32> to vector<16x16xbf16>
    %cst = arith.constant dense<0.000000e+00> : vector<16x32xf32>
    %6 = tpu.matmul %5, %0, %cst {dimension_numbers = #tpu.dot_dimension_numbers<[1], [0], [0], [1], [0, 0, 1, 1], [], []>} : vector<16x16xbf16>, vector<16x32xbf16>, vector<16x32xf32> -> vector<16x32xf32>
    %7 = vector.broadcast %2 : vector<1x32xf32> to vector<16x32xf32>
    %8 = arith.addf %6, %7 : vector<16x32xf32>
    %9 = vector.shape_cast %8 : vector<16x32xf32> to vector<8x2x32xf32>
    %c0_8 = arith.constant 0 : index
    %c0_9 = arith.constant 0 : index
    %c0_10 = arith.constant 0 : index
    %10 = vector.load %arg12[%c0_8, %c0_9, %c0_10] : memref<8x2x32xf32, #tpu.memory_space<vmem>>, vector<8x2x32xf32>
    tpu.vector_store %arg12[%c0_8, %c0_9, %c0_10], %9 {strides = array<i32>} : memref<8x2x32xf32, #tpu.memory_space<vmem>>, vector<8x2x32xf32>,
    %cst_11 = arith.constant 0.000000e+00 : f32
    %11 = vector.broadcast %cst_11 : f32 to vector<2x32xf32>
    %c0_i32 = arith.constant 0 : i32
    %12 = arith.index_cast %c0_i32 : i32 to index
    %c0_12 = arith.constant 0 : index
    %c0_13 = arith.constant 0 : index
    %13 = vector.load %arg12[%12, %c0_12, %c0_13] : memref<8x2x32xf32, #tpu.memory_space<vmem>>, vector<1x2x32xf32>
    %14 = vector.shape_cast %13 : vector<1x2x32xf32> to vector<2x32xf32>
    %15 = arith.truncf %11 : vector<2x32xf32> to vector<2x32xbf16>
    %cst_14 = arith.constant dense<0.000000e+00> : vector<2x32xf32>
    %16 = tpu.matmul %15, %1, %cst_14 {dimension_numbers = #tpu.dot_dimension_numbers<[1], [0], [0], [1], [0, 0, 1, 1], [], []>} : vector<2x32xbf16>, vector<32x32xbf16>, vector<2x32xf32> -> vector<2x32xf32>
    %17 = arith.addf %14, %16 : vector<2x32xf32>
    %18 = math.tanh %17 : vector<2x32xf32>
    %19 = arith.index_cast %c0_i32 : i32 to index
    %c0_15 = arith.constant 0 : index
    %c0_16 = arith.constant 0 : index
    %20 = vector.load %arg12[%19, %c0_15, %c0_16] : memref<8x2x32xf32, #tpu.memory_space<vmem>>, vector<1x2x32xf32>
    %21 = vector.shape_cast %20 : vector<1x2x32xf32> to vector<2x32xf32>
    %22 = vector.shape_cast %18 : vector<2x32xf32> to vector<1x2x32xf32>
    tpu.vector_store %arg12[%19, %c0_15, %c0_16], %22 {strides = array<i32>} : memref<8x2x32xf32, #tpu.memory_space<vmem>>, vector<1x2x32xf32>,
    %c1_i32 = arith.constant 1 : i32
    %23 = arith.index_cast %c1_i32 : i32 to index
    %c0_17 = arith.constant 0 : index
    %c0_18 = arith.constant 0 : index
    %24 = vector.load %arg12[%23, %c0_17, %c0_18] : memref<8x2x32xf32, #tpu.memory_space<vmem>>, vector<1x2x32xf32>
    %25 = vector.shape_cast %24 : vector<1x2x32xf32> to vector<2x32xf32>
    %26 = arith.truncf %18 : vector<2x32xf32> to vector<2x32xbf16>
    %cst_19 = arith.constant dense<0.000000e+00> : vector<2x32xf32>
    %27 = tpu.matmul %26, %1, %cst_19 {dimension_numbers = #tpu.dot_dimension_numbers<[1], [0], [0], [1], [0, 0, 1, 1], [], []>} : vector<2x32xbf16>, vector<32x32xbf16>, vector<2x32xf32> -> vector<2x32xf32>
    %28 = arith.addf %25, %27 : vector<2x32xf32>
    %29 = math.tanh %28 : vector<2x32xf32>
    %30 = arith.index_cast %c1_i32 : i32 to index
    %c0_20 = arith.constant 0 : index
    %c0_21 = arith.constant 0 : index
    %31 = vector.load %arg12[%30, %c0_20, %c0_21] : memref<8x2x32xf32, #tpu.memory_space<vmem>>, vector<1x2x32xf32>
    %32 = vector.shape_cast %31 : vector<1x2x32xf32> to vector<2x32xf32>
    %33 = vector.shape_cast %29 : vector<2x32xf32> to vector<1x2x32xf32>
    tpu.vector_store %arg12[%30, %c0_20, %c0_21], %33 {strides = array<i32>} : memref<8x2x32xf32, #tpu.memory_space<vmem>>, vector<1x2x32xf32>,
    %c2_i32 = arith.constant 2 : i32
    %34 = arith.index_cast %c2_i32 : i32 to index
    %c0_22 = arith.constant 0 : index
    %c0_23 = arith.constant 0 : index
    %35 = vector.load %arg12[%34, %c0_22, %c0_23] : memref<8x2x32xf32, #tpu.memory_space<vmem>>, vector<1x2x32xf32>
    %36 = vector.shape_cast %35 : vector<1x2x32xf32> to vector<2x32xf32>
    %37 = arith.truncf %29 : vector<2x32xf32> to vector<2x32xbf16>
    %cst_24 = arith.constant dense<0.000000e+00> : vector<2x32xf32>
    %38 = tpu.matmul %37, %1, %cst_24 {dimension_numbers = #tpu.dot_dimension_numbers<[1], [0], [0], [1], [0, 0, 1, 1], [], []>} : vector<2x32xbf16>, vector<32x32xbf16>, vector<2x32xf32> -> vector<2x32xf32>
    %39 = arith.addf %36, %38 : vector<2x32xf32>
    %40 = math.tanh %39 : vector<2x32xf32>
    %41 = arith.index_cast %c2_i32 : i32 to index
    %c0_25 = arith.constant 0 : index
    %c0_26 = arith.constant 0 : index
    %42 = vector.load %arg12[%41, %c0_25, %c0_26] : memref<8x2x32xf32, #tpu.memory_space<vmem>>, vector<1x2x32xf32>
    %43 = vector.shape_cast %42 : vector<1x2x32xf32> to vector<2x32xf32>
    %44 = vector.shape_cast %40 : vector<2x32xf32> to vector<1x2x32xf32>
    tpu.vector_store %arg12[%41, %c0_25, %c0_26], %44 {strides = array<i32>} : memref<8x2x32xf32, #tpu.memory_space<vmem>>, vector<1x2x32xf32>,
    %c3_i32 = arith.constant 3 : i32
    %45 = arith.index_cast %c3_i32 : i32 to index
    %c0_27 = arith.constant 0 : index
    %c0_28 = arith.constant 0 : index
    %46 = vector.load %arg12[%45, %c0_27, %c0_28] : memref<8x2x32xf32, #tpu.memory_space<vmem>>, vector<1x2x32xf32>
    %47 = vector.shape_cast %46 : vector<1x2x32xf32> to vector<2x32xf32>
    %48 = arith.truncf %40 : vector<2x32xf32> to vector<2x32xbf16>
    %cst_29 = arith.constant dense<0.000000e+00> : vector<2x32xf32>
    %49 = tpu.matmul %48, %1, %cst_29 {dimension_numbers = #tpu.dot_dimension_numbers<[1], [0], [0], [1], [0, 0, 1, 1], [], []>} : vector<2x32xbf16>, vector<32x32xbf16>, vector<2x32xf32> -> vector<2x32xf32>
    %50 = arith.addf %47, %49 : vector<2x32xf32>
    %51 = math.tanh %50 : vector<2x32xf32>
    %52 = arith.index_cast %c3_i32 : i32 to index
    %c0_30 = arith.constant 0 : index
    %c0_31 = arith.constant 0 : index
    %53 = vector.load %arg12[%52, %c0_30, %c0_31] : memref<8x2x32xf32, #tpu.memory_space<vmem>>, vector<1x2x32xf32>
    %54 = vector.shape_cast %53 : vector<1x2x32xf32> to vector<2x32xf32>
    %55 = vector.shape_cast %51 : vector<2x32xf32> to vector<1x2x32xf32>
    tpu.vector_store %arg12[%52, %c0_30, %c0_31], %55 {strides = array<i32>} : memref<8x2x32xf32, #tpu.memory_space<vmem>>, vector<1x2x32xf32>,
    %c4_i32 = arith.constant 4 : i32
    %56 = arith.index_cast %c4_i32 : i32 to index
    %c0_32 = arith.constant 0 : index
    %c0_33 = arith.constant 0 : index
    %57 = vector.load %arg12[%56, %c0_32, %c0_33] : memref<8x2x32xf32, #tpu.memory_space<vmem>>, vector<1x2x32xf32>
    %58 = vector.shape_cast %57 : vector<1x2x32xf32> to vector<2x32xf32>
    %59 = arith.truncf %51 : vector<2x32xf32> to vector<2x32xbf16>
    %cst_34 = arith.constant dense<0.000000e+00> : vector<2x32xf32>
    %60 = tpu.matmul %59, %1, %cst_34 {dimension_numbers = #tpu.dot_dimension_numbers<[1], [0], [0], [1], [0, 0, 1, 1], [], []>} : vector<2x32xbf16>, vector<32x32xbf16>, vector<2x32xf32> -> vector<2x32xf32>
    %61 = arith.addf %58, %60 : vector<2x32xf32>
    %62 = math.tanh %61 : vector<2x32xf32>
    %63 = arith.index_cast %c4_i32 : i32 to index
    %c0_35 = arith.constant 0 : index
    %c0_36 = arith.constant 0 : index
    %64 = vector.load %arg12[%63, %c0_35, %c0_36] : memref<8x2x32xf32, #tpu.memory_space<vmem>>, vector<1x2x32xf32>
    %65 = vector.shape_cast %64 : vector<1x2x32xf32> to vector<2x32xf32>
    %66 = vector.shape_cast %62 : vector<2x32xf32> to vector<1x2x32xf32>
    tpu.vector_store %arg12[%63, %c0_35, %c0_36], %66 {strides = array<i32>} : memref<8x2x32xf32, #tpu.memory_space<vmem>>, vector<1x2x32xf32>,
    %c5_i32 = arith.constant 5 : i32
    %67 = arith.index_cast %c5_i32 : i32 to index
    %c0_37 = arith.constant 0 : index
    %c0_38 = arith.constant 0 : index
    %68 = vector.load %arg12[%67, %c0_37, %c0_38] : memref<8x2x32xf32, #tpu.memory_space<vmem>>, vector<1x2x32xf32>
    %69 = vector.shape_cast %68 : vector<1x2x32xf32> to vector<2x32xf32>
    %70 = arith.truncf %62 : vector<2x32xf32> to vector<2x32xbf16>
    %cst_39 = arith.constant dense<0.000000e+00> : vector<2x32xf32>
    %71 = tpu.matmul %70, %1, %cst_39 {dimension_numbers = #tpu.dot_dimension_numbers<[1], [0], [0], [1], [0, 0, 1, 1], [], []>} : vector<2x32xbf16>, vector<32x32xbf16>, vector<2x32xf32> -> vector<2x32xf32>
    %72 = arith.addf %69, %71 : vector<2x32xf32>
    %73 = math.tanh %72 : vector<2x32xf32>
    %74 = arith.index_cast %c5_i32 : i32 to index
    %c0_40 = arith.constant 0 : index
    %c0_41 = arith.constant 0 : index
    %75 = vector.load %arg12[%74, %c0_40, %c0_41] : memref<8x2x32xf32, #tpu.memory_space<vmem>>, vector<1x2x32xf32>
    %76 = vector.shape_cast %75 : vector<1x2x32xf32> to vector<2x32xf32>
    %77 = vector.shape_cast %73 : vector<2x32xf32> to vector<1x2x32xf32>
    tpu.vector_store %arg12[%74, %c0_40, %c0_41], %77 {strides = array<i32>} : memref<8x2x32xf32, #tpu.memory_space<vmem>>, vector<1x2x32xf32>,
    %c6_i32 = arith.constant 6 : i32
    %78 = arith.index_cast %c6_i32 : i32 to index
    %c0_42 = arith.constant 0 : index
    %c0_43 = arith.constant 0 : index
    %79 = vector.load %arg12[%78, %c0_42, %c0_43] : memref<8x2x32xf32, #tpu.memory_space<vmem>>, vector<1x2x32xf32>
    %80 = vector.shape_cast %79 : vector<1x2x32xf32> to vector<2x32xf32>
    %81 = arith.truncf %73 : vector<2x32xf32> to vector<2x32xbf16>
    %cst_44 = arith.constant dense<0.000000e+00> : vector<2x32xf32>
    %82 = tpu.matmul %81, %1, %cst_44 {dimension_numbers = #tpu.dot_dimension_numbers<[1], [0], [0], [1], [0, 0, 1, 1], [], []>} : vector<2x32xbf16>, vector<32x32xbf16>, vector<2x32xf32> -> vector<2x32xf32>
    %83 = arith.addf %80, %82 : vector<2x32xf32>
    %84 = math.tanh %83 : vector<2x32xf32>
    %85 = arith.index_cast %c6_i32 : i32 to index
    %c0_45 = arith.constant 0 : index
    %c0_46 = arith.constant 0 : index
    %86 = vector.load %arg12[%85, %c0_45, %c0_46] : memref<8x2x32xf32, #tpu.memory_space<vmem>>, vector<1x2x32xf32>
    %87 = vector.shape_cast %86 : vector<1x2x32xf32> to vector<2x32xf32>
    %88 = vector.shape_cast %84 : vector<2x32xf32> to vector<1x2x32xf32>
    tpu.vector_store %arg12[%85, %c0_45, %c0_46], %88 {strides = array<i32>} : memref<8x2x32xf32, #tpu.memory_space<vmem>>, vector<1x2x32xf32>,
    %c7_i32 = arith.constant 7 : i32
    %89 = arith.index_cast %c7_i32 : i32 to index
    %c0_47 = arith.constant 0 : index
    %c0_48 = arith.constant 0 : index
    %90 = vector.load %arg12[%89, %c0_47, %c0_48] : memref<8x2x32xf32, #tpu.memory_space<vmem>>, vector<1x2x32xf32>
    %91 = vector.shape_cast %90 : vector<1x2x32xf32> to vector<2x32xf32>
    %92 = arith.truncf %84 : vector<2x32xf32> to vector<2x32xbf16>
    %cst_49 = arith.constant dense<0.000000e+00> : vector<2x32xf32>
    %93 = tpu.matmul %92, %1, %cst_49 {dimension_numbers = #tpu.dot_dimension_numbers<[1], [0], [0], [1], [0, 0, 1, 1], [], []>} : vector<2x32xbf16>, vector<32x32xbf16>, vector<2x32xf32> -> vector<2x32xf32>
    %94 = arith.addf %91, %93 : vector<2x32xf32>
    %95 = math.tanh %94 : vector<2x32xf32>
    %96 = arith.index_cast %c7_i32 : i32 to index
    %c0_50 = arith.constant 0 : index
    %c0_51 = arith.constant 0 : index
    %97 = vector.load %arg12[%96, %c0_50, %c0_51] : memref<8x2x32xf32, #tpu.memory_space<vmem>>, vector<1x2x32xf32>
    %98 = vector.shape_cast %97 : vector<1x2x32xf32> to vector<2x32xf32>
    %99 = vector.shape_cast %95 : vector<2x32xf32> to vector<1x2x32xf32>
    tpu.vector_store %arg12[%96, %c0_50, %c0_51], %99 {strides = array<i32>} : memref<8x2x32xf32, #tpu.memory_space<vmem>>, vector<1x2x32xf32>,
    %c8_i32 = arith.constant 8 : i32
    %c0_52 = arith.constant 0 : index
    %c0_53 = arith.constant 0 : index
    %c0_54 = arith.constant 0 : index
    %100 = vector.load %arg11[%c0_52, %c0_53, %c0_54] : memref<2x2x32xf32, #tpu.memory_space<vmem>>, vector<1x2x32xf32>
    %101 = vector.shape_cast %100 : vector<1x2x32xf32> to vector<2x32xf32>
    %102 = vector.shape_cast %95 : vector<2x32xf32> to vector<1x2x32xf32>
    tpu.vector_store %arg11[%c0_52, %c0_53, %c0_54], %102 {strides = array<i32>} : memref<2x2x32xf32, #tpu.memory_space<vmem>>, vector<1x2x32xf32>,
    %c0_55 = arith.constant 0 : index
    %c0_56 = arith.constant 0 : index
    %103 = vector.load %arg5[%c0_55, %c0_56] : memref<32x32xbf16, #tpu.memory_space<vmem>>, vector<32x32xbf16>
    %c0_57 = arith.constant 0 : index
    %c0_58 = arith.constant 0 : index
    %104 = vector.load %arg6[%c0_57, %c0_58] : memref<32x32xbf16, #tpu.memory_space<vmem>>, vector<32x32xbf16>
    %c0_59 = arith.constant 0 : index
    %c0_60 = arith.constant 0 : index
    %105 = vector.load %arg7[%c0_59, %c0_60] : memref<1x32xf32, #tpu.memory_space<vmem>>, vector<1x32xf32>
    %c0_61 = arith.constant 0 : index
    %c0_62 = arith.constant 0 : index
    %c0_63 = arith.constant 0 : index
    %106 = vector.load %arg12[%c0_61, %c0_62, %c0_63] : memref<8x2x32xf32, #tpu.memory_space<vmem>>, vector<8x2x32xf32>
    %107 = vector.shape_cast %106 : vector<8x2x32xf32> to vector<16x32xf32>
    %108 = arith.truncf %107 : vector<16x32xf32> to vector<16x32xbf16>
    %cst_64 = arith.constant dense<0.000000e+00> : vector<16x32xf32>
    %109 = tpu.matmul %108, %103, %cst_64 {dimension_numbers = #tpu.dot_dimension_numbers<[1], [0], [0], [1], [0, 0, 1, 1], [], []>} : vector<16x32xbf16>, vector<32x32xbf16>, vector<16x32xf32> -> vector<16x32xf32>
    %110 = vector.broadcast %105 : vector<1x32xf32> to vector<16x32xf32>
    %111 = arith.addf %109, %110 : vector<16x32xf32>
    %112 = vector.shape_cast %111 : vector<16x32xf32> to vector<8x2x32xf32>
    %c0_65 = arith.constant 0 : index
    %c0_66 = arith.constant 0 : index
    %c0_67 = arith.constant 0 : index
    %113 = vector.load %arg12[%c0_65, %c0_66, %c0_67] : memref<8x2x32xf32, #tpu.memory_space<vmem>>, vector<8x2x32xf32>
    tpu.vector_store %arg12[%c0_65, %c0_66, %c0_67], %112 {strides = array<i32>} : memref<8x2x32xf32, #tpu.memory_space<vmem>>, vector<8x2x32xf32>,
    %cst_68 = arith.constant 0.000000e+00 : f32
    %114 = vector.broadcast %cst_68 : f32 to vector<2x32xf32>
    %c0_i32_69 = arith.constant 0 : i32
    %115 = arith.index_cast %c0_i32_69 : i32 to index
    %c0_70 = arith.constant 0 : index
    %c0_71 = arith.constant 0 : index
    %116 = vector.load %arg12[%115, %c0_70, %c0_71] : memref<8x2x32xf32, #tpu.memory_space<vmem>>, vector<1x2x32xf32>
    %117 = vector.shape_cast %116 : vector<1x2x32xf32> to vector<2x32xf32>
    %118 = arith.truncf %114 : vector<2x32xf32> to vector<2x32xbf16>
    %cst_72 = arith.constant dense<0.000000e+00> : vector<2x32xf32>
    %119 = tpu.matmul %118, %104, %cst_72 {dimension_numbers = #tpu.dot_dimension_numbers<[1], [0], [0], [1], [0, 0, 1, 1], [], []>} : vector<2x32xbf16>, vector<32x32xbf16>, vector<2x32xf32> -> vector<2x32xf32>
    %120 = arith.addf %117, %119 : vector<2x32xf32>
    %121 = math.tanh %120 : vector<2x32xf32>
    %122 = arith.index_cast %c0_i32_69 : i32 to index
    %c0_73 = arith.constant 0 : index
    %c0_74 = arith.constant 0 : index
    %123 = vector.load %arg12[%122, %c0_73, %c0_74] : memref<8x2x32xf32, #tpu.memory_space<vmem>>, vector<1x2x32xf32>
    %124 = vector.shape_cast %123 : vector<1x2x32xf32> to vector<2x32xf32>
    %125 = vector.shape_cast %121 : vector<2x32xf32> to vector<1x2x32xf32>
    tpu.vector_store %arg12[%122, %c0_73, %c0_74], %125 {strides = array<i32>} : memref<8x2x32xf32, #tpu.memory_space<vmem>>, vector<1x2x32xf32>,
    %c1_i32_75 = arith.constant 1 : i32
    %126 = arith.index_cast %c1_i32_75 : i32 to index
    %c0_76 = arith.constant 0 : index
    %c0_77 = arith.constant 0 : index
    %127 = vector.load %arg12[%126, %c0_76, %c0_77] : memref<8x2x32xf32, #tpu.memory_space<vmem>>, vector<1x2x32xf32>
    %128 = vector.shape_cast %127 : vector<1x2x32xf32> to vector<2x32xf32>
    %129 = arith.truncf %121 : vector<2x32xf32> to vector<2x32xbf16>
    %cst_78 = arith.constant dense<0.000000e+00> : vector<2x32xf32>
    %130 = tpu.matmul %129, %104, %cst_78 {dimension_numbers = #tpu.dot_dimension_numbers<[1], [0], [0], [1], [0, 0, 1, 1], [], []>} : vector<2x32xbf16>, vector<32x32xbf16>, vector<2x32xf32> -> vector<2x32xf32>
    %131 = arith.addf %128, %130 : vector<2x32xf32>
    %132 = math.tanh %131 : vector<2x32xf32>
    %133 = arith.index_cast %c1_i32_75 : i32 to index
    %c0_79 = arith.constant 0 : index
    %c0_80 = arith.constant 0 : index
    %134 = vector.load %arg12[%133, %c0_79, %c0_80] : memref<8x2x32xf32, #tpu.memory_space<vmem>>, vector<1x2x32xf32>
    %135 = vector.shape_cast %134 : vector<1x2x32xf32> to vector<2x32xf32>
    %136 = vector.shape_cast %132 : vector<2x32xf32> to vector<1x2x32xf32>
    tpu.vector_store %arg12[%133, %c0_79, %c0_80], %136 {strides = array<i32>} : memref<8x2x32xf32, #tpu.memory_space<vmem>>, vector<1x2x32xf32>,
    %c2_i32_81 = arith.constant 2 : i32
    %137 = arith.index_cast %c2_i32_81 : i32 to index
    %c0_82 = arith.constant 0 : index
    %c0_83 = arith.constant 0 : index
    %138 = vector.load %arg12[%137, %c0_82, %c0_83] : memref<8x2x32xf32, #tpu.memory_space<vmem>>, vector<1x2x32xf32>
    %139 = vector.shape_cast %138 : vector<1x2x32xf32> to vector<2x32xf32>
    %140 = arith.truncf %132 : vector<2x32xf32> to vector<2x32xbf16>
    %cst_84 = arith.constant dense<0.000000e+00> : vector<2x32xf32>
    %141 = tpu.matmul %140, %104, %cst_84 {dimension_numbers = #tpu.dot_dimension_numbers<[1], [0], [0], [1], [0, 0, 1, 1], [], []>} : vector<2x32xbf16>, vector<32x32xbf16>, vector<2x32xf32> -> vector<2x32xf32>
    %142 = arith.addf %139, %141 : vector<2x32xf32>
    %143 = math.tanh %142 : vector<2x32xf32>
    %144 = arith.index_cast %c2_i32_81 : i32 to index
    %c0_85 = arith.constant 0 : index
    %c0_86 = arith.constant 0 : index
    %145 = vector.load %arg12[%144, %c0_85, %c0_86] : memref<8x2x32xf32, #tpu.memory_space<vmem>>, vector<1x2x32xf32>
    %146 = vector.shape_cast %145 : vector<1x2x32xf32> to vector<2x32xf32>
    %147 = vector.shape_cast %143 : vector<2x32xf32> to vector<1x2x32xf32>
    tpu.vector_store %arg12[%144, %c0_85, %c0_86], %147 {strides = array<i32>} : memref<8x2x32xf32, #tpu.memory_space<vmem>>, vector<1x2x32xf32>,
    %c3_i32_87 = arith.constant 3 : i32
    %148 = arith.index_cast %c3_i32_87 : i32 to index
    %c0_88 = arith.constant 0 : index
    %c0_89 = arith.constant 0 : index
    %149 = vector.load %arg12[%148, %c0_88, %c0_89] : memref<8x2x32xf32, #tpu.memory_space<vmem>>, vector<1x2x32xf32>
    %150 = vector.shape_cast %149 : vector<1x2x32xf32> to vector<2x32xf32>
    %151 = arith.truncf %143 : vector<2x32xf32> to vector<2x32xbf16>
    %cst_90 = arith.constant dense<0.000000e+00> : vector<2x32xf32>
    %152 = tpu.matmul %151, %104, %cst_90 {dimension_numbers = #tpu.dot_dimension_numbers<[1], [0], [0], [1], [0, 0, 1, 1], [], []>} : vector<2x32xbf16>, vector<32x32xbf16>, vector<2x32xf32> -> vector<2x32xf32>
    %153 = arith.addf %150, %152 : vector<2x32xf32>
    %154 = math.tanh %153 : vector<2x32xf32>
    %155 = arith.index_cast %c3_i32_87 : i32 to index
    %c0_91 = arith.constant 0 : index
    %c0_92 = arith.constant 0 : index
    %156 = vector.load %arg12[%155, %c0_91, %c0_92] : memref<8x2x32xf32, #tpu.memory_space<vmem>>, vector<1x2x32xf32>
    %157 = vector.shape_cast %156 : vector<1x2x32xf32> to vector<2x32xf32>
    %158 = vector.shape_cast %154 : vector<2x32xf32> to vector<1x2x32xf32>
    tpu.vector_store %arg12[%155, %c0_91, %c0_92], %158 {strides = array<i32>} : memref<8x2x32xf32, #tpu.memory_space<vmem>>, vector<1x2x32xf32>,
    %c4_i32_93 = arith.constant 4 : i32
    %159 = arith.index_cast %c4_i32_93 : i32 to index
    %c0_94 = arith.constant 0 : index
    %c0_95 = arith.constant 0 : index
    %160 = vector.load %arg12[%159, %c0_94, %c0_95] : memref<8x2x32xf32, #tpu.memory_space<vmem>>, vector<1x2x32xf32>
    %161 = vector.shape_cast %160 : vector<1x2x32xf32> to vector<2x32xf32>
    %162 = arith.truncf %154 : vector<2x32xf32> to vector<2x32xbf16>
    %cst_96 = arith.constant dense<0.000000e+00> : vector<2x32xf32>
    %163 = tpu.matmul %162, %104, %cst_96 {dimension_numbers = #tpu.dot_dimension_numbers<[1], [0], [0], [1], [0, 0, 1, 1], [], []>} : vector<2x32xbf16>, vector<32x32xbf16>, vector<2x32xf32> -> vector<2x32xf32>
    %164 = arith.addf %161, %163 : vector<2x32xf32>
    %165 = math.tanh %164 : vector<2x32xf32>
    %166 = arith.index_cast %c4_i32_93 : i32 to index
    %c0_97 = arith.constant 0 : index
    %c0_98 = arith.constant 0 : index
    %167 = vector.load %arg12[%166, %c0_97, %c0_98] : memref<8x2x32xf32, #tpu.memory_space<vmem>>, vector<1x2x32xf32>
    %168 = vector.shape_cast %167 : vector<1x2x32xf32> to vector<2x32xf32>
    %169 = vector.shape_cast %165 : vector<2x32xf32> to vector<1x2x32xf32>
    tpu.vector_store %arg12[%166, %c0_97, %c0_98], %169 {strides = array<i32>} : memref<8x2x32xf32, #tpu.memory_space<vmem>>, vector<1x2x32xf32>,
    %c5_i32_99 = arith.constant 5 : i32
    %170 = arith.index_cast %c5_i32_99 : i32 to index
    %c0_100 = arith.constant 0 : index
    %c0_101 = arith.constant 0 : index
    %171 = vector.load %arg12[%170, %c0_100, %c0_101] : memref<8x2x32xf32, #tpu.memory_space<vmem>>, vector<1x2x32xf32>
    %172 = vector.shape_cast %171 : vector<1x2x32xf32> to vector<2x32xf32>
    %173 = arith.truncf %165 : vector<2x32xf32> to vector<2x32xbf16>
    %cst_102 = arith.constant dense<0.000000e+00> : vector<2x32xf32>
    %174 = tpu.matmul %173, %104, %cst_102 {dimension_numbers = #tpu.dot_dimension_numbers<[1], [0], [0], [1], [0, 0, 1, 1], [], []>} : vector<2x32xbf16>, vector<32x32xbf16>, vector<2x32xf32> -> vector<2x32xf32>
    %175 = arith.addf %172, %174 : vector<2x32xf32>
    %176 = math.tanh %175 : vector<2x32xf32>
    %177 = arith.index_cast %c5_i32_99 : i32 to index
    %c0_103 = arith.constant 0 : index
    %c0_104 = arith.constant 0 : index
    %178 = vector.load %arg12[%177, %c0_103, %c0_104] : memref<8x2x32xf32, #tpu.memory_space<vmem>>, vector<1x2x32xf32>
    %179 = vector.shape_cast %178 : vector<1x2x32xf32> to vector<2x32xf32>
    %180 = vector.shape_cast %176 : vector<2x32xf32> to vector<1x2x32xf32>
    tpu.vector_store %arg12[%177, %c0_103, %c0_104], %180 {strides = array<i32>} : memref<8x2x32xf32, #tpu.memory_space<vmem>>, vector<1x2x32xf32>,
    %c6_i32_105 = arith.constant 6 : i32
    %181 = arith.index_cast %c6_i32_105 : i32 to index
    %c0_106 = arith.constant 0 : index
    %c0_107 = arith.constant 0 : index
    %182 = vector.load %arg12[%181, %c0_106, %c0_107] : memref<8x2x32xf32, #tpu.memory_space<vmem>>, vector<1x2x32xf32>
    %183 = vector.shape_cast %182 : vector<1x2x32xf32> to vector<2x32xf32>
    %184 = arith.truncf %176 : vector<2x32xf32> to vector<2x32xbf16>
    %cst_108 = arith.constant dense<0.000000e+00> : vector<2x32xf32>
    %185 = tpu.matmul %184, %104, %cst_108 {dimension_numbers = #tpu.dot_dimension_numbers<[1], [0], [0], [1], [0, 0, 1, 1], [], []>} : vector<2x32xbf16>, vector<32x32xbf16>, vector<2x32xf32> -> vector<2x32xf32>
    %186 = arith.addf %183, %185 : vector<2x32xf32>
    %187 = math.tanh %186 : vector<2x32xf32>
    %188 = arith.index_cast %c6_i32_105 : i32 to index
    %c0_109 = arith.constant 0 : index
    %c0_110 = arith.constant 0 : index
    %189 = vector.load %arg12[%188, %c0_109, %c0_110] : memref<8x2x32xf32, #tpu.memory_space<vmem>>, vector<1x2x32xf32>
    %190 = vector.shape_cast %189 : vector<1x2x32xf32> to vector<2x32xf32>
    %191 = vector.shape_cast %187 : vector<2x32xf32> to vector<1x2x32xf32>
    tpu.vector_store %arg12[%188, %c0_109, %c0_110], %191 {strides = array<i32>} : memref<8x2x32xf32, #tpu.memory_space<vmem>>, vector<1x2x32xf32>,
    %c7_i32_111 = arith.constant 7 : i32
    %192 = arith.index_cast %c7_i32_111 : i32 to index
    %c0_112 = arith.constant 0 : index
    %c0_113 = arith.constant 0 : index
    %193 = vector.load %arg12[%192, %c0_112, %c0_113] : memref<8x2x32xf32, #tpu.memory_space<vmem>>, vector<1x2x32xf32>
    %194 = vector.shape_cast %193 : vector<1x2x32xf32> to vector<2x32xf32>
    %195 = arith.truncf %187 : vector<2x32xf32> to vector<2x32xbf16>
    %cst_114 = arith.constant dense<0.000000e+00> : vector<2x32xf32>
    %196 = tpu.matmul %195, %104, %cst_114 {dimension_numbers = #tpu.dot_dimension_numbers<[1], [0], [0], [1], [0, 0, 1, 1], [], []>} : vector<2x32xbf16>, vector<32x32xbf16>, vector<2x32xf32> -> vector<2x32xf32>
    %197 = arith.addf %194, %196 : vector<2x32xf32>
    %198 = math.tanh %197 : vector<2x32xf32>
    %199 = arith.index_cast %c7_i32_111 : i32 to index
    %c0_115 = arith.constant 0 : index
    %c0_116 = arith.constant 0 : index
    %200 = vector.load %arg12[%199, %c0_115, %c0_116] : memref<8x2x32xf32, #tpu.memory_space<vmem>>, vector<1x2x32xf32>
    %201 = vector.shape_cast %200 : vector<1x2x32xf32> to vector<2x32xf32>
    %202 = vector.shape_cast %198 : vector<2x32xf32> to vector<1x2x32xf32>
    tpu.vector_store %arg12[%199, %c0_115, %c0_116], %202 {strides = array<i32>} : memref<8x2x32xf32, #tpu.memory_space<vmem>>, vector<1x2x32xf32>,
    %c8_i32_117 = arith.constant 8 : i32
    %c1 = arith.constant 1 : index
    %c0_118 = arith.constant 0 : index
    %c0_119 = arith.constant 0 : index
    %203 = vector.load %arg11[%c1, %c0_118, %c0_119] : memref<2x2x32xf32, #tpu.memory_space<vmem>>, vector<1x2x32xf32>
    %204 = vector.shape_cast %203 : vector<1x2x32xf32> to vector<2x32xf32>
    %205 = vector.shape_cast %198 : vector<2x32xf32> to vector<1x2x32xf32>
    tpu.vector_store %arg11[%c1, %c0_118, %c0_119], %205 {strides = array<i32>} : memref<2x2x32xf32, #tpu.memory_space<vmem>>, vector<1x2x32xf32>,
    %c0_120 = arith.constant 0 : index
    %c0_121 = arith.constant 0 : index
    %c0_122 = arith.constant 0 : index
    %206 = vector.load %arg12[%c0_120, %c0_121, %c0_122] : memref<8x2x32xf32, #tpu.memory_space<vmem>>, vector<8x2x32xf32>
    %207 = vector.shape_cast %206 : vector<8x2x32xf32> to vector<16x32xf32>
    %208 = arith.truncf %207 : vector<16x32xf32> to vector<16x32xbf16>
    %c0_123 = arith.constant 0 : index
    %c0_124 = arith.constant 0 : index
    %209 = vector.load %arg8[%c0_123, %c0_124] : memref<32x128xbf16, #tpu.memory_space<vmem>>, vector<32x128xbf16>
    %cst_125 = arith.constant dense<0.000000e+00> : vector<16x128xf32>
    %210 = tpu.matmul %208, %209, %cst_125 {dimension_numbers = #tpu.dot_dimension_numbers<[1], [0], [0], [1], [0, 0, 1, 1], [], []>} : vector<16x32xbf16>, vector<32x128xbf16>, vector<16x128xf32> -> vector<16x128xf32>
    %c0_126 = arith.constant 0 : index
    %c0_127 = arith.constant 0 : index
    %211 = vector.load %arg9[%c0_126, %c0_127] : memref<1x128xf32, #tpu.memory_space<vmem>>, vector<1x128xf32>
    %212 = vector.broadcast %211 : vector<1x128xf32> to vector<16x128xf32>
    %213 = arith.addf %210, %212 : vector<16x128xf32>
    %214 = vector.shape_cast %213 : vector<16x128xf32> to vector<8x2x128xf32>
    %c0_128 = arith.constant 0 : index
    %c0_129 = arith.constant 0 : index
    %c0_130 = arith.constant 0 : index
    %215 = vector.load %arg10[%c0_128, %c0_129, %c0_130] : memref<8x2x128xf32, #tpu.memory_space<vmem>>, vector<8x2x128xf32>
    tpu.vector_store %arg10[%c0_128, %c0_129, %c0_130], %214 {strides = array<i32>} : memref<8x2x128xf32, #tpu.memory_space<vmem>>, vector<8x2x128xf32>,
    return
  }
  func.func @transform_0(%arg0: i32) -> (i32, i32, i32) {
    %c0_i32 = arith.constant 0 : i32
    %c0_i32_0 = arith.constant 0 : i32
    %c0_i32_1 = arith.constant 0 : i32
    return %c0_i32, %arg0, %c0_i32_0 : i32, i32, i32
  }
  func.func @transform_1(%arg0: i32) -> (i32, i32) {
    %c0_i32 = arith.constant 0 : i32
    %c0_i32_0 = arith.constant 0 : i32
    %c0_i32_1 = arith.constant 0 : i32
    return %c0_i32, %c0_i32_0 : i32, i32
  }
  func.func @transform_2(%arg0: i32) -> (i32, i32) {
    %c0_i32 = arith.constant 0 : i32
    %c0_i32_0 = arith.constant 0 : i32
    %c0_i32_1 = arith.constant 0 : i32
    return %c0_i32, %c0_i32_0 : i32, i32
  }
  func.func @transform_3(%arg0: i32) -> (i32, i32) {
    %c0_i32 = arith.constant 0 : i32
    %c0_i32_0 = arith.constant 0 : i32
    %c0_i32_1 = arith.constant 0 : i32
    return %c0_i32, %c0_i32_0 : i32, i32
  }
  func.func @transform_4(%arg0: i32) -> (i32, i32) {
    %c0_i32 = arith.constant 0 : i32
    %c0_i32_0 = arith.constant 0 : i32
    %c0_i32_1 = arith.constant 0 : i32
    return %c0_i32, %c0_i32_0 : i32, i32
  }
  func.func @transform_5(%arg0: i32) -> (i32, i32) {
    %c0_i32 = arith.constant 0 : i32
    %c0_i32_0 = arith.constant 0 : i32
    %c0_i32_1 = arith.constant 0 : i32
    return %c0_i32, %c0_i32_0 : i32, i32
  }
  func.func @transform_6(%arg0: i32) -> (i32, i32) {
    %c0_i32 = arith.constant 0 : i32
    %c0_i32_0 = arith.constant 0 : i32
    %c0_i32_1 = arith.constant 0 : i32
    return %c0_i32, %c0_i32_0 : i32, i32
  }
  func.func @transform_7(%arg0: i32) -> (i32, i32) {
    %c0_i32 = arith.constant 0 : i32
    %c0_i32_0 = arith.constant 0 : i32
    %c0_i32_1 = arith.constant 0 : i32
    return %c0_i32, %c0_i32_0 : i32, i32
  }
  func.func @transform_8(%arg0: i32) -> (i32, i32) {
    %c0_i32 = arith.constant 0 : i32
    %c0_i32_0 = arith.constant 0 : i32
    %c0_i32_1 = arith.constant 0 : i32
    return %c0_i32, %c0_i32_0 : i32, i32
  }
  func.func @transform_9(%arg0: i32) -> (i32, i32, i32) {
    %c0_i32 = arith.constant 0 : i32
    %c0_i32_0 = arith.constant 0 : i32
    %c0_i32_1 = arith.constant 0 : i32
    return %c0_i32, %arg0, %c0_i32_0 : i32, i32, i32
  }
  func.func @transform_10(%arg0: i32) -> (i32, i32, i32) {
    %c0_i32 = arith.constant 0 : i32
    %c0_i32_0 = arith.constant 0 : i32
    %c0_i32_1 = arith.constant 0 : i32
    return %c0_i32, %arg0, %c0_i32_0 : i32, i32, i32
  }
}

</mosaic_0001>

<llo_original>
// kernel: model_forward.1
$region0: #{model_forward.1}
  #allocation0 [shape = 'u32[]', space=smem, size = 0x4, offset = 0x4, fixed_abs, tag = 'smem constant byte address 0x4 - core index']
  #allocation1 [shape = 'u32[144,128]{1,0:T(1,128)}', space=vmem, size = 0x12000, scoped, tag = 'internal scratch']
  #allocation2 [shape = 'f32[8,2,32]{2,1,0:T(2,128)}', space=vmem, size = 0x2000, scoped, tag = 'scratch operand']
  %s0 = inlined_call_operand.vmem [shape: f32[8,2,16], index: 0, kind: input, shape index: {}]
  %s1 = inlined_call_operand.hbm [shape: bf16[16,32], index: 1, kind: input, shape index: {}]
  %s2 = inlined_call_operand.vmem [shape: bf16[32,32], index: 2, kind: input, shape index: {}]
  %s3 = inlined_call_operand.vmem [shape: f32[1,32], index: 3, kind: input, shape index: {}]
  %s4 = inlined_call_operand.vmem [shape: bf16[32,32], index: 4, kind: input, shape index: {}]
  %s5 = inlined_call_operand.vmem [shape: bf16[32,32], index: 5, kind: input, shape index: {}]
  %s6 = inlined_call_operand.vmem [shape: f32[1,32], index: 6, kind: input, shape index: {}]
  %s7 = inlined_call_operand.hbm [shape: bf16[32,128], index: 7, kind: input, shape index: {}]
  %s8 = inlined_call_operand.vmem [shape: f32[1,128], index: 8, kind: input, shape index: {}]
  %s9 = inlined_call_operand.vmem [shape: f32[8,2,128], index: 9, kind: output, shape index: {0}]
  %s10 = inlined_call_operand.hbm [shape: f32[2,2,32], index: 10, kind: output, shape index: {1}]
  %11 = xla_tuple %s9, %s10
  %s12 = sld [smem:[#allocation0]]
  $region62: #{model_forward.1} parent=0
    _
  %s14 = ssub.s32 1, %s12
  %s15 = scalar_select 0, %s14, %s12
  $region1: #{model_forward.1} parent=0
    #allocation3 [shape = 'u8[4096]{0}', space=vmem, size = 0x1000, scoped, tag = 'input window, operand 1, single buffered']
    #allocation4 [shape = 's32[1]{0}', space=sflag, size = 0x4, scoped, tag = 'scoped memory for model_forward.1']
    #allocation5 [shape = 's32[1]{0}', space=sflag, size = 0x4, scoped, tag = 'scoped memory for model_forward.1']
    #allocation6 [shape = 'u8[8192]{0}', space=vmem, size = 0x2000, scoped, tag = 'input window, operand 7, single buffered']
    #allocation7 [shape = 's32[1]{0}', space=sflag, size = 0x4, scoped, tag = 'scoped memory for model_forward.1']
    #allocation8 [shape = 'u8[2048]{0}', space=vmem, size = 0x800, scoped, tag = 'output window, operand 1, single buffered']
    %16 = vsyncpa [#allocation4], 0
    %17 = vsyncpa [#allocation7], 0
    %18 = vsyncpa [#allocation5], 0
    // Predicated region
    $region2: #{model_forward.1} parent=1 // pred_check
      _
    $region3: #{model_forward.1} parent=1 // pred_check_branch
      %20 = sbr.rel (0) target = $region5
    $region4: #{model_forward.1} parent=1 // pred_region
      _
    $region5: #{model_forward.1} parent=1 // pred_fallthru
      _
    // Predicated region
    $region6: #{model_forward.1} parent=1 // pred_check
      _
    $region7: #{model_forward.1} parent=1 // pred_check_branch
      %22 = sbr.rel (0) target = $region9
    $region8: #{model_forward.1} parent=1 // pred_region
      %s24 = ssub.s32 128, 128
      %25 = vsyncadd [#allocation4], %s24
      %s26 = sshll.u32 [#allocation3], 4
      %s27 = int_to_ptr.vmem [resolvable:$true] %s26
      %32 = dma.hbm_to_vmem [thread:$0]  %s1, 128, %s27, [#allocation4], 64, 64, 4
    $region9: #{model_forward.1} parent=1 // pred_fallthru
      _
    // Predicated region
    $region10: #{model_forward.1} parent=1 // pred_check
      _
    $region11: #{model_forward.1} parent=1 // pred_check_branch
      %34 = sbr.rel (0) target = $region13
    $region12: #{model_forward.1} parent=1 // pred_region
      _
    $region13: #{model_forward.1} parent=1 // pred_fallthru
      _
    // Predicated region
    $region14: #{model_forward.1} parent=1 // pred_check
      _
    $region15: #{model_forward.1} parent=1 // pred_check_branch
      %36 = sbr.rel (0) target = $region17
    $region16: #{model_forward.1} parent=1 // pred_region
      _
    $region17: #{model_forward.1} parent=1 // pred_fallthru
      _
    // Predicated region
    $region18: #{model_forward.1} parent=1 // pred_check
      _
    $region19: #{model_forward.1} parent=1 // pred_check_branch
      %38 = sbr.rel (0) target = $region21
    $region20: #{model_forward.1} parent=1 // pred_region
      _
    $region21: #{model_forward.1} parent=1 // pred_fallthru
      _
    // Predicated region
    $region22: #{model_forward.1} parent=1 // pred_check
      _
    $region23: #{model_forward.1} parent=1 // pred_check_branch
      %40 = sbr.rel (0) target = $region25
    $region24: #{model_forward.1} parent=1 // pred_region
      _
    $region25: #{model_forward.1} parent=1 // pred_fallthru
      _
    // Predicated region
    $region26: #{model_forward.1} parent=1 // pred_check
      _
    $region27: #{model_forward.1} parent=1 // pred_check_branch
      %42 = sbr.rel (0) target = $region29
    $region28: #{model_forward.1} parent=1 // pred_region
      _
    $region29: #{model_forward.1} parent=1 // pred_fallthru
      _
    // Predicated region
    $region30: #{model_forward.1} parent=1 // pred_check
      _
    $region31: #{model_forward.1} parent=1 // pred_check_branch
      %44 = sbr.rel (0) target = $region33
    $region32: #{model_forward.1} parent=1 // pred_region
      %s46 = ssub.s32 256, 256
      %47 = vsyncadd [#allocation7], %s46
      %s48 = sshll.u32 [#allocation6], 4
      %s49 = int_to_ptr.vmem [resolvable:$true] %s48
      %54 = dma.hbm_to_vmem [thread:$0]  %s7, 256, %s49, [#allocation7], 64, 64, 4
    $region33: #{model_forward.1} parent=1 // pred_fallthru
      _
    // Predicated region
    $region34: #{model_forward.1} parent=1 // pred_check
      _
    $region35: #{model_forward.1} parent=1 // pred_check_branch
      %56 = sbr.rel (0) target = $region37
    $region36: #{model_forward.1} parent=1 // pred_region
      _
    $region37: #{model_forward.1} parent=1 // pred_fallthru
      _
    // Predicated region
    $region38: #{model_forward.1} parent=1 // pred_check
      _
    $region39: #{model_forward.1} parent=1 // pred_check_branch
      %58 = sbr.rel (0) target = $region41
    $region40: #{model_forward.1} parent=1 // pred_region
      %59 = dma.done [#allocation4], 128
    $region41: #{model_forward.1} parent=1 // pred_fallthru
      _
    // Predicated region
    $region42: #{model_forward.1} parent=1 // pred_check
      _
    $region43: #{model_forward.1} parent=1 // pred_check_branch
      %61 = sbr.rel (0) target = $region45
    $region44: #{model_forward.1} parent=1 // pred_region
      %62 = dma.done [#allocation7], 256
    $region45: #{model_forward.1} parent=1 // pred_fallthru
      _
    %v64 = vld [vmem:[#allocation3] sm:$0xf]
    %v65 = vld [vmem:[#allocation3 + $0x4] sm:$0xf]
    %v66 = vld [vmem:[%s2] sm:$0xf]
    %v67 = vld [vmem:[%s2 + $0x4] sm:$0xf]
    %v68 = vld [vmem:[%s2 + $0x8] sm:$0xf]
    %v69 = vld [vmem:[%s2 + $0xc] sm:$0xf]
    %v70 = vld [vmem:[%s3] sm:$0x1]
    %v71 = vld [vmem:[%s0] sm:$0x3]
    %v72 = vld [vmem:[%s0 + $0x2] sm:$0x3]
    %v73 = vld [vmem:[%s0 + $0x4] sm:$0x3]
    %v74 = vld [vmem:[%s0 + $0x6] sm:$0x3]
    %v75 = vld [vmem:[%s0 + $0x8] sm:$0x3]
    %v76 = vld [vmem:[%s0 + $0xa] sm:$0x3]
    %v77 = vld [vmem:[%s0 + $0xc] sm:$0x3]
    %v78 = vld [vmem:[%s0 + $0xe] sm:$0x3]
    %v87 = vcombine.low %v71, %v72
    %v88 = vcombine.low %v73, %v74
    %v90 = vunpack.c.l.s4 1983009808
    %v91 = vunpack.c.0.s8 %v90
    %v92 = vlaneseq
    %v93 = vshrl.u32 %v92, 7
    %v94 = vsub.s32 %v91, %v93
    %v95 = vrot.slane %v87, %v94
    %v97 = vunpack.c.l.s4 1983009808
    %v98 = vunpack.c.0.s8 %v97
    %v99 = vlaneseq
    %v100 = vshrl.u32 %v99, 7
    %v101 = vsub.s32 %v98, %v100
    %v102 = vrot.slane %v88, %v101
    %v103 = vcombine.low %v95, %v102
    %v104 = vcombine.low %v75, %v76
    %v105 = vcombine.low %v77, %v78
    %v107 = vunpack.c.l.s4 1983009808
    %v108 = vunpack.c.0.s8 %v107
    %v109 = vlaneseq
    %v110 = vshrl.u32 %v109, 7
    %v111 = vsub.s32 %v108, %v110
    %v112 = vrot.slane %v104, %v111
    %v114 = vunpack.c.l.s4 1983009808
    %v115 = vunpack.c.0.s8 %v114
    %v116 = vlaneseq
    %v117 = vshrl.u32 %v116, 7
    %v118 = vsub.s32 %v115, %v117
    %v119 = vrot.slane %v105, %v118
    %v120 = vcombine.low %v112, %v119
    %v123 = vpack.c.bf16 %v120, %v103
    %v125 = vlaneseq
    %v126 = vshrl.u32 %v125, 7
    %v127 = vsub.s32 0, %v126
    %v128 = vrot.slane %v70, %v127
    %v132 = vunpack.c.l.b16 %v64
    %v133 = vunpack.c.l.b16 %v65
    %v134 = vpack.c.b16 %v133, %v132
    %vm136 = vcmask 130048
    %v138 = vsel %vm136, %v123, 0
    %140 = vmatprep.subr.bf16.mxu0 0
    %141 = vmatpush1.bf16.msra.mxu0 %v134
    %142 = vmatprep.subr.bf16.mxu0 0
    %143 = vmatpush1.bf16.msra.mxu0 0
    %144 = vmatprep.subr.bf16.mxu0 0
    %145 = vmatpush1.bf16.msra.mxu0 0
    %146 = vmatprep.subr.bf16.mxu0 0
    %147 = vmatpush1.bf16.msra.mxu0 0
    %148 = vmatprep.subr.bf16.mxu0 0
    %149 = vmatpush1.bf16.msra.mxu0 0
    %150 = vmatprep.subr.bf16.mxu0 0
    %151 = vmatpush1.bf16.msra.mxu0 0
    %152 = vmatprep.subr.bf16.mxu0 0
    %153 = vmatpush1.bf16.msra.mxu0 0
    %154 = vmatprep.subr.bf16.mxu0 0
    %155 = vmatpush1.bf16.msra.mxu0 0
    %156 = vmatprep.subr.bf16.mxu0 0
    %157 = vmatpush1.bf16.msra.mxu0 0
    %158 = vmatprep.subr.bf16.mxu0 0
    %159 = vmatpush1.bf16.msra.mxu0 0
    %160 = vmatprep.subr.bf16.mxu0 0
    %161 = vmatpush1.bf16.msra.mxu0 0
    %162 = vmatprep.subr.bf16.mxu0 0
    %163 = vmatpush1.bf16.msra.mxu0 0
    %164 = vmatprep.subr.bf16.mxu0 0
    %165 = vmatpush1.bf16.msra.mxu0 0
    %166 = vmatprep.subr.bf16.mxu0 0
    %167 = vmatpush1.bf16.msra.mxu0 0
    %168 = vmatprep.subr.bf16.mxu0 0
    %169 = vmatpush1.bf16.msra.mxu0 0
    %170 = vmatprep.subr.bf16.mxu0 0
    %171 = vmatpush1.bf16.msra.mxu0 0
    %172 = vmatprep.mubr.bf16.mxu0 0
    %173 = vmatmul.mubr.bf16.gmra.mrb[0].mxu0 %v138
    %v174 = vpop.f32.mrb[0].mxu0
    %v175 = vadd.f32 %v128, %v174
    %v176 = vpop.f32.mrb[0].mxu0
    %v177 = vpop.f32.mrb[0].mxu0
    %v178 = vadd.f32 %v128, %v177
    %v179 = vpop.f32.mrb[0].mxu0
    %180 = vdwg.mxu0
    %v183 = vcombine.high %v175, %v175
    %v185 = vunpack.c.l.s4 1983009808
    %v186 = vunpack.c.0.s8 %v185
    %v187 = vlaneseq
    %v188 = vshrl.u32 %v187, 7
    %v189 = vsub.s32 %v186, %v188
    %v190 = vrot.slane %v175, %v189
    %v192 = vunpack.c.l.s4 1983009808
    %v193 = vunpack.c.0.s8 %v192
    %v194 = vlaneseq
    %v195 = vshrl.u32 %v194, 7
    %v196 = vsub.s32 %v193, %v195
    %v197 = vrot.slane %v183, %v196
    %v198 = vcombine.high %v190, %v190
    %v199 = vcombine.high %v197, %v197
    %v200 = vcombine.high %v178, %v178
    %v202 = vunpack.c.l.s4 1983009808
    %v203 = vunpack.c.0.s8 %v202
    %v204 = vlaneseq
    %v205 = vshrl.u32 %v204, 7
    %v206 = vsub.s32 %v203, %v205
    %v207 = vrot.slane %v178, %v206
    %v209 = vunpack.c.l.s4 1983009808
    %v210 = vunpack.c.0.s8 %v209
    %v211 = vlaneseq
    %v212 = vshrl.u32 %v211, 7
    %v213 = vsub.s32 %v210, %v212
    %v214 = vrot.slane %v200, %v213
    %v215 = vcombine.high %v207, %v207
    %v216 = vcombine.high %v214, %v214
    %vm225 = vcmask 254976
    %226 = vst.msk [vmem:[#allocation2] sm:$0x3] %vm225, %v190
    %227 = vst.msk [vmem:[#allocation2 + $0x2] sm:$0x3] %vm225, %v198
    %228 = vst.msk [vmem:[#allocation2 + $0x4] sm:$0x3] %vm225, %v197
    %229 = vst.msk [vmem:[#allocation2 + $0x6] sm:$0x3] %vm225, %v199
    %230 = vst.msk [vmem:[#allocation2 + $0x8] sm:$0x3] %vm225, %v207
    %231 = vst.msk [vmem:[#allocation2 + $0xa] sm:$0x3] %vm225, %v215
    %232 = vst.msk [vmem:[#allocation2 + $0xc] sm:$0x3] %vm225, %v214
    %233 = vst.msk [vmem:[#allocation2 + $0xe] sm:$0x3] %vm225, %v216
    %v234 = vld [vmem:[#allocation2] sm:$0x3]
    %v239 = vunpack.c.l.b16 %v66
    %v240 = vunpack.c.l.b16 %v67
    %v241 = vunpack.c.l.b16 %v68
    %v242 = vunpack.c.l.b16 %v69
    %v243 = vpack.c.b16 %v240, %v239
    %v244 = vpack.c.b16 %v242, %v241
    %vm247 = vcmask 261120
    %v249 = vsel %vm247, 0, 0
    %251 = vmatprep.subr.bf16.mxu0 0
    %252 = vmatpush1.bf16.msra.mxu0 %v243
    %253 = vmatprep.subr.bf16.mxu0 0
    %254 = vmatpush1.bf16.msra.mxu0 %v244
    %255 = vmatprep.subr.bf16.mxu0 0
    %256 = vmatpush1.bf16.msra.mxu0 0
    %257 = vmatprep.subr.bf16.mxu0 0
    %258 = vmatpush1.bf16.msra.mxu0 0
    %259 = vmatprep.subr.bf16.mxu0 0
    %260 = vmatpush1.bf16.msra.mxu0 0
    %261 = vmatprep.subr.bf16.mxu0 0
    %262 = vmatpush1.bf16.msra.mxu0 0
    %263 = vmatprep.subr.bf16.mxu0 0
    %264 = vmatpush1.bf16.msra.mxu0 0
    %265 = vmatprep.subr.bf16.mxu0 0
    %266 = vmatpush1.bf16.msra.mxu0 0
    %267 = vmatprep.subr.bf16.mxu0 0
    %268 = vmatpush1.bf16.msra.mxu0 0
    %269 = vmatprep.subr.bf16.mxu0 0
    %270 = vmatpush1.bf16.msra.mxu0 0
    %271 = vmatprep.subr.bf16.mxu0 0
    %272 = vmatpush1.bf16.msra.mxu0 0
    %273 = vmatprep.subr.bf16.mxu0 0
    %274 = vmatpush1.bf16.msra.mxu0 0
    %275 = vmatprep.subr.bf16.mxu0 0
    %276 = vmatpush1.bf16.msra.mxu0 0
    %277 = vmatprep.subr.bf16.mxu0 0
    %278 = vmatpush1.bf16.msra.mxu0 0
    %279 = vmatprep.subr.bf16.mxu0 0
    %280 = vmatpush1.bf16.msra.mxu0 0
    %281 = vmatprep.subr.bf16.mxu0 0
    %282 = vmatpush1.bf16.msra.mxu0 0
    %283 = vmatprep.mubr.bf16.mxu0 0
    %284 = vmatmul.mubr.bf16.gmra.mrb[0].mxu0 %v249
    %v285 = vpop.f32.mrb[0].mxu0
    %v286 = vadd.f32 0.0, %v285
    %v287 = vpop.f32.mrb[0].mxu0
    %v288 = vpop.f32.mrb[0].mxu0
    %v289 = vpop.f32.mrb[0].mxu0
    %290 = vdwg.mxu0
    %v291 = vadd.f32 %v234, %v286
    %v292 = vtanh.pop %v291
    %293 = vst.msk [vmem:[#allocation2] sm:$0x3] %vm225, %v292
    %s294 = scalar_lea.vmem [#allocation2], 2
    %v295 = vld [vmem:[%s294] sm:$0x3]
    %v296 = vpack.c.bf16 %v292, %v292
    %v298 = vsel %vm247, %v296, 0
    %300 = vmatprep.subr.bf16.mxu0 0
    %301 = vmatpush1.bf16.msra.mxu0 %v243
    %302 = vmatprep.subr.bf16.mxu0 0
    %303 = vmatpush1.bf16.msra.mxu0 %v244
    %304 = vmatprep.subr.bf16.mxu0 0
    %305 = vmatpush1.bf16.msra.mxu0 0
    %306 = vmatprep.subr.bf16.mxu0 0
    %307 = vmatpush1.bf16.msra.mxu0 0
    %308 = vmatprep.subr.bf16.mxu0 0
    %309 = vmatpush1.bf16.msra.mxu0 0
    %310 = vmatprep.subr.bf16.mxu0 0
    %311 = vmatpush1.bf16.msra.mxu0 0
    %312 = vmatprep.subr.bf16.mxu0 0
    %313 = vmatpush1.bf16.msra.mxu0 0
    %314 = vmatprep.subr.bf16.mxu0 0
    %315 = vmatpush1.bf16.msra.mxu0 0
    %316 = vmatprep.subr.bf16.mxu0 0
    %317 = vmatpush1.bf16.msra.mxu0 0
    %318 = vmatprep.subr.bf16.mxu0 0
    %319 = vmatpush1.bf16.msra.mxu0 0
    %320 = vmatprep.subr.bf16.mxu0 0
    %321 = vmatpush1.bf16.msra.mxu0 0
    %322 = vmatprep.subr.bf16.mxu0 0
    %323 = vmatpush1.bf16.msra.mxu0 0
    %324 = vmatprep.subr.bf16.mxu0 0
    %325 = vmatpush1.bf16.msra.mxu0 0
    %326 = vmatprep.subr.bf16.mxu0 0
    %327 = vmatpush1.bf16.msra.mxu0 0
    %328 = vmatprep.subr.bf16.mxu0 0
    %329 = vmatpush1.bf16.msra.mxu0 0
    %330 = vmatprep.subr.bf16.mxu0 0
    %331 = vmatpush1.bf16.msra.mxu0 0
    %332 = vmatprep.mubr.bf16.mxu0 0
    %333 = vmatmul.mubr.bf16.gmra.mrb[0].mxu0 %v298
    %v334 = vpop.f32.mrb[0].mxu0
    %v335 = vadd.f32 0.0, %v334
    %v336 = vpop.f32.mrb[0].mxu0
    %v337 = vpop.f32.mrb[0].mxu0
    %v338 = vpop.f32.mrb[0].mxu0
    %339 = vdwg.mxu0
    %v340 = vadd.f32 %v295, %v335
    %v341 = vtanh.pop %v340
    %342 = vst.msk [vmem:[%s294] sm:$0x3] %vm225, %v341
    %s343 = scalar_lea.vmem [#allocation2], 4
    %v344 = vld [vmem:[%s343] sm:$0x3]
    %v345 = vpack.c.bf16 %v341, %v341
    %v347 = vsel %vm247, %v345, 0
    %349 = vmatprep.subr.bf16.mxu0 0
    %350 = vmatpush1.bf16.msra.mxu0 %v243
    %351 = vmatprep.subr.bf16.mxu0 0
    %352 = vmatpush1.bf16.msra.mxu0 %v244
    %353 = vmatprep.subr.bf16.mxu0 0
    %354 = vmatpush1.bf16.msra.mxu0 0
    %355 = vmatprep.subr.bf16.mxu0 0
    %356 = vmatpush1.bf16.msra.mxu0 0
    %357 = vmatprep.subr.bf16.mxu0 0
    %358 = vmatpush1.bf16.msra.mxu0 0
    %359 = vmatprep.subr.bf16.mxu0 0
    %360 = vmatpush1.bf16.msra.mxu0 0
    %361 = vmatprep.subr.bf16.mxu0 0
    %362 = vmatpush1.bf16.msra.mxu0 0
    %363 = vmatprep.subr.bf16.mxu0 0
    %364 = vmatpush1.bf16.msra.mxu0 0
    %365 = vmatprep.subr.bf16.mxu0 0
    %366 = vmatpush1.bf16.msra.mxu0 0
    %367 = vmatprep.subr.bf16.mxu0 0
    %368 = vmatpush1.bf16.msra.mxu0 0
    %369 = vmatprep.subr.bf16.mxu0 0
    %370 = vmatpush1.bf16.msra.mxu0 0
    %371 = vmatprep.subr.bf16.mxu0 0
    %372 = vmatpush1.bf16.msra.mxu0 0
    %373 = vmatprep.subr.bf16.mxu0 0
    %374 = vmatpush1.bf16.msra.mxu0 0
    %375 = vmatprep.subr.bf16.mxu0 0
    %376 = vmatpush1.bf16.msra.mxu0 0
    %377 = vmatprep.subr.bf16.mxu0 0
    %378 = vmatpush1.bf16.msra.mxu0 0
    %379 = vmatprep.subr.bf16.mxu0 0
    %380 = vmatpush1.bf16.msra.mxu0 0
    %381 = vmatprep.mubr.bf16.mxu0 0
    %382 = vmatmul.mubr.bf16.gmra.mrb[0].mxu0 %v347
    %v383 = vpop.f32.mrb[0].mxu0
    %v384 = vadd.f32 0.0, %v383
    %v385 = vpop.f32.mrb[0].mxu0
    %v386 = vpop.f32.mrb[0].mxu0
    %v387 = vpop.f32.mrb[0].mxu0
    %388 = vdwg.mxu0
    %v389 = vadd.f32 %v344, %v384
    %v390 = vtanh.pop %v389
    %391 = vst.msk [vmem:[%s343] sm:$0x3] %vm225, %v390
    %s392 = scalar_lea.vmem [#allocation2], 6
    %v393 = vld [vmem:[%s392] sm:$0x3]
    %v394 = vpack.c.bf16 %v390, %v390
    %v396 = vsel %vm247, %v394, 0
    %398 = vmatprep.subr.bf16.mxu0 0
    %399 = vmatpush1.bf16.msra.mxu0 %v243
    %400 = vmatprep.subr.bf16.mxu0 0
    %401 = vmatpush1.bf16.msra.mxu0 %v244
    %402 = vmatprep.subr.bf16.mxu0 0
    %403 = vmatpush1.bf16.msra.mxu0 0
    %404 = vmatprep.subr.bf16.mxu0 0
    %405 = vmatpush1.bf16.msra.mxu0 0
    %406 = vmatprep.subr.bf16.mxu0 0
    %407 = vmatpush1.bf16.msra.mxu0 0
    %408 = vmatprep.subr.bf16.mxu0 0
    %409 = vmatpush1.bf16.msra.mxu0 0
    %410 = vmatprep.subr.bf16.mxu0 0
    %411 = vmatpush1.bf16.msra.mxu0 0
    %412 = vmatprep.subr.bf16.mxu0 0
    %413 = vmatpush1.bf16.msra.mxu0 0
    %414 = vmatprep.subr.bf16.mxu0 0
    %415 = vmatpush1.bf16.msra.mxu0 0
    %416 = vmatprep.subr.bf16.mxu0 0
    %417 = vmatpush1.bf16.msra.mxu0 0
    %418 = vmatprep.subr.bf16.mxu0 0
    %419 = vmatpush1.bf16.msra.mxu0 0
    %420 = vmatprep.subr.bf16.mxu0 0
    %421 = vmatpush1.bf16.msra.mxu0 0
    %422 = vmatprep.subr.bf16.mxu0 0
    %423 = vmatpush1.bf16.msra.mxu0 0
    %424 = vmatprep.subr.bf16.mxu0 0
    %425 = vmatpush1.bf16.msra.mxu0 0
    %426 = vmatprep.subr.bf16.mxu0 0
    %427 = vmatpush1.bf16.msra.mxu0 0
    %428 = vmatprep.subr.bf16.mxu0 0
    %429 = vmatpush1.bf16.msra.mxu0 0
    %430 = vmatprep.mubr.bf16.mxu0 0
    %431 = vmatmul.mubr.bf16.gmra.mrb[0].mxu0 %v396
    %v432 = vpop.f32.mrb[0].mxu0
    %v433 = vadd.f32 0.0, %v432
    %v434 = vpop.f32.mrb[0].mxu0
    %v435 = vpop.f32.mrb[0].mxu0
    %v436 = vpop.f32.mrb[0].mxu0
    %437 = vdwg.mxu0
    %v438 = vadd.f32 %v393, %v433
    %v439 = vtanh.pop %v438
    %440 = vst.msk [vmem:[%s392] sm:$0x3] %vm225, %v439
    %s441 = scalar_lea.vmem [#allocation2], 8
    %v442 = vld [vmem:[%s441] sm:$0x3]
    %v443 = vpack.c.bf16 %v439, %v439
    %v445 = vsel %vm247, %v443, 0
    %447 = vmatprep.subr.bf16.mxu0 0
    %448 = vmatpush1.bf16.msra.mxu0 %v243
    %449 = vmatprep.subr.bf16.mxu0 0
    %450 = vmatpush1.bf16.msra.mxu0 %v244
    %451 = vmatprep.subr.bf16.mxu0 0
    %452 = vmatpush1.bf16.msra.mxu0 0
    %453 = vmatprep.subr.bf16.mxu0 0
    %454 = vmatpush1.bf16.msra.mxu0 0
    %455 = vmatprep.subr.bf16.mxu0 0
    %456 = vmatpush1.bf16.msra.mxu0 0
    %457 = vmatprep.subr.bf16.mxu0 0
    %458 = vmatpush1.bf16.msra.mxu0 0
    %459 = vmatprep.subr.bf16.mxu0 0
    %460 = vmatpush1.bf16.msra.mxu0 0
    %461 = vmatprep.subr.bf16.mxu0 0
    %462 = vmatpush1.bf16.msra.mxu0 0
    %463 = vmatprep.subr.bf16.mxu0 0
    %464 = vmatpush1.bf16.msra.mxu0 0
    %465 = vmatprep.subr.bf16.mxu0 0
    %466 = vmatpush1.bf16.msra.mxu0 0
    %467 = vmatprep.subr.bf16.mxu0 0
    %468 = vmatpush1.bf16.msra.mxu0 0
    %469 = vmatprep.subr.bf16.mxu0 0
    %470 = vmatpush1.bf16.msra.mxu0 0
    %471 = vmatprep.subr.bf16.mxu0 0
    %472 = vmatpush1.bf16.msra.mxu0 0
    %473 = vmatprep.subr.bf16.mxu0 0
    %474 = vmatpush1.bf16.msra.mxu0 0
    %475 = vmatprep.subr.bf16.mxu0 0
    %476 = vmatpush1.bf16.msra.mxu0 0
    %477 = vmatprep.subr.bf16.mxu0 0
    %478 = vmatpush1.bf16.msra.mxu0 0
    %479 = vmatprep.mubr.bf16.mxu0 0
    %480 = vmatmul.mubr.bf16.gmra.mrb[0].mxu0 %v445
    %v481 = vpop.f32.mrb[0].mxu0
    %v482 = vadd.f32 0.0, %v481
    %v483 = vpop.f32.mrb[0].mxu0
    %v484 = vpop.f32.mrb[0].mxu0
    %v485 = vpop.f32.mrb[0].mxu0
    %486 = vdwg.mxu0
    %v487 = vadd.f32 %v442, %v482
    %v488 = vtanh.pop %v487
    %489 = vst.msk [vmem:[%s441] sm:$0x3] %vm225, %v488
    %s490 = scalar_lea.vmem [#allocation2], 10
    %v491 = vld [vmem:[%s490] sm:$0x3]
    %v492 = vpack.c.bf16 %v488, %v488
    %v494 = vsel %vm247, %v492, 0
    %496 = vmatprep.subr.bf16.mxu0 0
    %497 = vmatpush1.bf16.msra.mxu0 %v243
    %498 = vmatprep.subr.bf16.mxu0 0
    %499 = vmatpush1.bf16.msra.mxu0 %v244
    %500 = vmatprep.subr.bf16.mxu0 0
    %501 = vmatpush1.bf16.msra.mxu0 0
    %502 = vmatprep.subr.bf16.mxu0 0
    %503 = vmatpush1.bf16.msra.mxu0 0
    %504 = vmatprep.subr.bf16.mxu0 0
    %505 = vmatpush1.bf16.msra.mxu0 0
    %506 = vmatprep.subr.bf16.mxu0 0
    %507 = vmatpush1.bf16.msra.mxu0 0
    %508 = vmatprep.subr.bf16.mxu0 0
    %509 = vmatpush1.bf16.msra.mxu0 0
    %510 = vmatprep.subr.bf16.mxu0 0
    %511 = vmatpush1.bf16.msra.mxu0 0
    %512 = vmatprep.subr.bf16.mxu0 0
    %513 = vmatpush1.bf16.msra.mxu0 0
    %514 = vmatprep.subr.bf16.mxu0 0
    %515 = vmatpush1.bf16.msra.mxu0 0
    %516 = vmatprep.subr.bf16.mxu0 0
    %517 = vmatpush1.bf16.msra.mxu0 0
    %518 = vmatprep.subr.bf16.mxu0 0
    %519 = vmatpush1.bf16.msra.mxu0 0
    %520 = vmatprep.subr.bf16.mxu0 0
    %521 = vmatpush1.bf16.msra.mxu0 0
    %522 = vmatprep.subr.bf16.mxu0 0
    %523 = vmatpush1.bf16.msra.mxu0 0
    %524 = vmatprep.subr.bf16.mxu0 0
    %525 = vmatpush1.bf16.msra.mxu0 0
    %526 = vmatprep.subr.bf16.mxu0 0
    %527 = vmatpush1.bf16.msra.mxu0 0
    %528 = vmatprep.mubr.bf16.mxu0 0
    %529 = vmatmul.mubr.bf16.gmra.mrb[0].mxu0 %v494
    %v530 = vpop.f32.mrb[0].mxu0
    %v531 = vadd.f32 0.0, %v530
    %v532 = vpop.f32.mrb[0].mxu0
    %v533 = vpop.f32.mrb[0].mxu0
    %v534 = vpop.f32.mrb[0].mxu0
    %535 = vdwg.mxu0
    %v536 = vadd.f32 %v491, %v531
    %v537 = vtanh.pop %v536
    %538 = vst.msk [vmem:[%s490] sm:$0x3] %vm225, %v537
    %s539 = scalar_lea.vmem [#allocation2], 12
    %v540 = vld [vmem:[%s539] sm:$0x3]
    %v541 = vpack.c.bf16 %v537, %v537
    %v543 = vsel %vm247, %v541, 0
    %545 = vmatprep.subr.bf16.mxu0 0
    %546 = vmatpush1.bf16.msra.mxu0 %v243
    %547 = vmatprep.subr.bf16.mxu0 0
    %548 = vmatpush1.bf16.msra.mxu0 %v244
    %549 = vmatprep.subr.bf16.mxu0 0
    %550 = vmatpush1.bf16.msra.mxu0 0
    %551 = vmatprep.subr.bf16.mxu0 0
    %552 = vmatpush1.bf16.msra.mxu0 0
    %553 = vmatprep.subr.bf16.mxu0 0
    %554 = vmatpush1.bf16.msra.mxu0 0
    %555 = vmatprep.subr.bf16.mxu0 0
    %556 = vmatpush1.bf16.msra.mxu0 0
    %557 = vmatprep.subr.bf16.mxu0 0
    %558 = vmatpush1.bf16.msra.mxu0 0
    %559 = vmatprep.subr.bf16.mxu0 0
    %560 = vmatpush1.bf16.msra.mxu0 0
    %561 = vmatprep.subr.bf16.mxu0 0
    %562 = vmatpush1.bf16.msra.mxu0 0
    %563 = vmatprep.subr.bf16.mxu0 0
    %564 = vmatpush1.bf16.msra.mxu0 0
    %565 = vmatprep.subr.bf16.mxu0 0
    %566 = vmatpush1.bf16.msra.mxu0 0
    %567 = vmatprep.subr.bf16.mxu0 0
    %568 = vmatpush1.bf16.msra.mxu0 0
    %569 = vmatprep.subr.bf16.mxu0 0
    %570 = vmatpush1.bf16.msra.mxu0 0
    %571 = vmatprep.subr.bf16.mxu0 0
    %572 = vmatpush1.bf16.msra.mxu0 0
    %573 = vmatprep.subr.bf16.mxu0 0
    %574 = vmatpush1.bf16.msra.mxu0 0
    %575 = vmatprep.subr.bf16.mxu0 0
    %576 = vmatpush1.bf16.msra.mxu0 0
    %577 = vmatprep.mubr.bf16.mxu0 0
    %578 = vmatmul.mubr.bf16.gmra.mrb[0].mxu0 %v543
    %v579 = vpop.f32.mrb[0].mxu0
    %v580 = vadd.f32 0.0, %v579
    %v581 = vpop.f32.mrb[0].mxu0
    %v582 = vpop.f32.mrb[0].mxu0
    %v583 = vpop.f32.mrb[0].mxu0
    %584 = vdwg.mxu0
    %v585 = vadd.f32 %v540, %v580
    %v586 = vtanh.pop %v585
    %587 = vst.msk [vmem:[%s539] sm:$0x3] %vm225, %v586
    %s588 = scalar_lea.vmem [#allocation2], 14
    %v589 = vld [vmem:[%s588] sm:$0x3]
    %v590 = vpack.c.bf16 %v586, %v586
    %v592 = vsel %vm247, %v590, 0
    %594 = vmatprep.subr.bf16.mxu0 0
    %595 = vmatpush1.bf16.msra.mxu0 %v243
    %596 = vmatprep.subr.bf16.mxu0 0
    %597 = vmatpush1.bf16.msra.mxu0 %v244
    %598 = vmatprep.subr.bf16.mxu0 0
    %599 = vmatpush1.bf16.msra.mxu0 0
    %600 = vmatprep.subr.bf16.mxu0 0
    %601 = vmatpush1.bf16.msra.mxu0 0
    %602 = vmatprep.subr.bf16.mxu0 0
    %603 = vmatpush1.bf16.msra.mxu0 0
    %604 = vmatprep.subr.bf16.mxu0 0
    %605 = vmatpush1.bf16.msra.mxu0 0
    %606 = vmatprep.subr.bf16.mxu0 0
    %607 = vmatpush1.bf16.msra.mxu0 0
    %608 = vmatprep.subr.bf16.mxu0 0
    %609 = vmatpush1.bf16.msra.mxu0 0
    %610 = vmatprep.subr.bf16.mxu0 0
    %611 = vmatpush1.bf16.msra.mxu0 0
    %612 = vmatprep.subr.bf16.mxu0 0
    %613 = vmatpush1.bf16.msra.mxu0 0
    %614 = vmatprep.subr.bf16.mxu0 0
    %615 = vmatpush1.bf16.msra.mxu0 0
    %616 = vmatprep.subr.bf16.mxu0 0
    %617 = vmatpush1.bf16.msra.mxu0 0
    %618 = vmatprep.subr.bf16.mxu0 0
    %619 = vmatpush1.bf16.msra.mxu0 0
    %620 = vmatprep.subr.bf16.mxu0 0
    %621 = vmatpush1.bf16.msra.mxu0 0
    %622 = vmatprep.subr.bf16.mxu0 0
    %623 = vmatpush1.bf16.msra.mxu0 0
    %624 = vmatprep.subr.bf16.mxu0 0
    %625 = vmatpush1.bf16.msra.mxu0 0
    %626 = vmatprep.mubr.bf16.mxu0 0
    %627 = vmatmul.mubr.bf16.gmra.mrb[0].mxu0 %v592
    %v628 = vpop.f32.mrb[0].mxu0
    %v629 = vadd.f32 0.0, %v628
    %v630 = vpop.f32.mrb[0].mxu0
    %v631 = vpop.f32.mrb[0].mxu0
    %v632 = vpop.f32.mrb[0].mxu0
    %633 = vdwg.mxu0
    %v634 = vadd.f32 %v589, %v629
    %v635 = vtanh.pop %v634
    %636 = vst.msk [vmem:[%s588] sm:$0x3] %vm225, %v635
    %637 = vst.msk [vmem:[#allocation8] sm:$0x3] %vm225, %v635
    %v638 = vld [vmem:[%s4] sm:$0xf]
    %v639 = vld [vmem:[%s4 + $0x4] sm:$0xf]
    %v640 = vld [vmem:[%s4 + $0x8] sm:$0xf]
    %v641 = vld [vmem:[%s4 + $0xc] sm:$0xf]
    %v642 = vld [vmem:[%s5] sm:$0xf]
    %v643 = vld [vmem:[%s5 + $0x4] sm:$0xf]
    %v644 = vld [vmem:[%s5 + $0x8] sm:$0xf]
    %v645 = vld [vmem:[%s5 + $0xc] sm:$0xf]
    %v646 = vld [vmem:[%s6] sm:$0x1]
    %v647 = vld [vmem:[#allocation2] sm:$0x3]
    %v648 = vld [vmem:[#allocation2 + $0x2] sm:$0x3]
    %v649 = vld [vmem:[#allocation2 + $0x4] sm:$0x3]
    %v650 = vld [vmem:[#allocation2 + $0x6] sm:$0x3]
    %v651 = vld [vmem:[#allocation2 + $0x8] sm:$0x3]
    %v652 = vld [vmem:[#allocation2 + $0xa] sm:$0x3]
    %v653 = vld [vmem:[#allocation2 + $0xc] sm:$0x3]
    %v654 = vld [vmem:[#allocation2 + $0xe] sm:$0x3]
    %v663 = vcombine.low %v647, %v648
    %v664 = vcombine.low %v649, %v650
    %v666 = vunpack.c.l.s4 1983009808
    %v667 = vunpack.c.0.s8 %v666
    %v668 = vlaneseq
    %v669 = vshrl.u32 %v668, 7
    %v670 = vsub.s32 %v667, %v669
    %v671 = vrot.slane %v663, %v670
    %v673 = vunpack.c.l.s4 1983009808
    %v674 = vunpack.c.0.s8 %v673
    %v675 = vlaneseq
    %v676 = vshrl.u32 %v675, 7
    %v677 = vsub.s32 %v674, %v676
    %v678 = vrot.slane %v664, %v677
    %v679 = vcombine.low %v671, %v678
    %v680 = vcombine.low %v651, %v652
    %v681 = vcombine.low %v653, %v654
    %v683 = vunpack.c.l.s4 1983009808
    %v684 = vunpack.c.0.s8 %v683
    %v685 = vlaneseq
    %v686 = vshrl.u32 %v685, 7
    %v687 = vsub.s32 %v684, %v686
    %v688 = vrot.slane %v680, %v687
    %v690 = vunpack.c.l.s4 1983009808
    %v691 = vunpack.c.0.s8 %v690
    %v692 = vlaneseq
    %v693 = vshrl.u32 %v692, 7
    %v694 = vsub.s32 %v691, %v693
    %v695 = vrot.slane %v681, %v694
    %v696 = vcombine.low %v688, %v695
    %v699 = vpack.c.bf16 %v696, %v679
    %v701 = vlaneseq
    %v702 = vshrl.u32 %v701, 7
    %v703 = vsub.s32 0, %v702
    %v704 = vrot.slane %v646, %v703
    %v710 = vunpack.c.l.b16 %v638
    %v711 = vunpack.c.l.b16 %v639
    %v712 = vunpack.c.l.b16 %v640
    %v713 = vunpack.c.l.b16 %v641
    %v714 = vpack.c.b16 %v711, %v710
    %v715 = vpack.c.b16 %v713, %v712
    %v719 = vsel %vm247, %v699, 0
    %721 = vmatprep.subr.bf16.mxu0 0
    %722 = vmatpush1.bf16.msra.mxu0 %v714
    %723 = vmatprep.subr.bf16.mxu0 0
    %724 = vmatpush1.bf16.msra.mxu0 %v715
    %725 = vmatprep.subr.bf16.mxu0 0
    %726 = vmatpush1.bf16.msra.mxu0 0
    %727 = vmatprep.subr.bf16.mxu0 0
    %728 = vmatpush1.bf16.msra.mxu0 0
    %729 = vmatprep.subr.bf16.mxu0 0
    %730 = vmatpush1.bf16.msra.mxu0 0
    %731 = vmatprep.subr.bf16.mxu0 0
    %732 = vmatpush1.bf16.msra.mxu0 0
    %733 = vmatprep.subr.bf16.mxu0 0
    %734 = vmatpush1.bf16.msra.mxu0 0
    %735 = vmatprep.subr.bf16.mxu0 0
    %736 = vmatpush1.bf16.msra.mxu0 0
    %737 = vmatprep.subr.bf16.mxu0 0
    %738 = vmatpush1.bf16.msra.mxu0 0
    %739 = vmatprep.subr.bf16.mxu0 0
    %740 = vmatpush1.bf16.msra.mxu0 0
    %741 = vmatprep.subr.bf16.mxu0 0
    %742 = vmatpush1.bf16.msra.mxu0 0
    %743 = vmatprep.subr.bf16.mxu0 0
    %744 = vmatpush1.bf16.msra.mxu0 0
    %745 = vmatprep.subr.bf16.mxu0 0
    %746 = vmatpush1.bf16.msra.mxu0 0
    %747 = vmatprep.subr.bf16.mxu0 0
    %748 = vmatpush1.bf16.msra.mxu0 0
    %749 = vmatprep.subr.bf16.mxu0 0
    %750 = vmatpush1.bf16.msra.mxu0 0
    %751 = vmatprep.subr.bf16.mxu0 0
    %752 = vmatpush1.bf16.msra.mxu0 0
    %753 = vmatprep.mubr.bf16.mxu0 0
    %754 = vmatmul.mubr.bf16.gmra.mrb[0].mxu0 %v719
    %v755 = vpop.f32.mrb[0].mxu0
    %v756 = vadd.f32 %v704, %v755
    %v757 = vpop.f32.mrb[0].mxu0
    %v758 = vpop.f32.mrb[0].mxu0
    %v759 = vadd.f32 %v704, %v758
    %v760 = vpop.f32.mrb[0].mxu0
    %761 = vdwg.mxu0
    %v764 = vcombine.high %v756, %v756
    %v766 = vunpack.c.l.s4 1983009808
    %v767 = vunpack.c.0.s8 %v766
    %v768 = vlaneseq
    %v769 = vshrl.u32 %v768, 7
    %v770 = vsub.s32 %v767, %v769
    %v771 = vrot.slane %v756, %v770
    %v773 = vunpack.c.l.s4 1983009808
    %v774 = vunpack.c.0.s8 %v773
    %v775 = vlaneseq
    %v776 = vshrl.u32 %v775, 7
    %v777 = vsub.s32 %v774, %v776
    %v778 = vrot.slane %v764, %v777
    %v779 = vcombine.high %v771, %v771
    %v780 = vcombine.high %v778, %v778
    %v781 = vcombine.high %v759, %v759
    %v783 = vunpack.c.l.s4 1983009808
    %v784 = vunpack.c.0.s8 %v783
    %v785 = vlaneseq
    %v786 = vshrl.u32 %v785, 7
    %v787 = vsub.s32 %v784, %v786
    %v788 = vrot.slane %v759, %v787
    %v790 = vunpack.c.l.s4 1983009808
    %v791 = vunpack.c.0.s8 %v790
    %v792 = vlaneseq
    %v793 = vshrl.u32 %v792, 7
    %v794 = vsub.s32 %v791, %v793
    %v795 = vrot.slane %v781, %v794
    %v796 = vcombine.high %v788, %v788
    %v797 = vcombine.high %v795, %v795
    %806 = vst.msk [vmem:[#allocation2] sm:$0x3] %vm225, %v771
    %807 = vst.msk [vmem:[#allocation2 + $0x2] sm:$0x3] %vm225, %v779
    %808 = vst.msk [vmem:[#allocation2 + $0x4] sm:$0x3] %vm225, %v778
    %809 = vst.msk [vmem:[#allocation2 + $0x6] sm:$0x3] %vm225, %v780
    %810 = vst.msk [vmem:[#allocation2 + $0x8] sm:$0x3] %vm225, %v788
    %811 = vst.msk [vmem:[#allocation2 + $0xa] sm:$0x3] %vm225, %v796
    %812 = vst.msk [vmem:[#allocation2 + $0xc] sm:$0x3] %vm225, %v795
    %813 = vst.msk [vmem:[#allocation2 + $0xe] sm:$0x3] %vm225, %v797
    %v814 = vld [vmem:[#allocation2] sm:$0x3]
    %v819 = vunpack.c.l.b16 %v642
    %v820 = vunpack.c.l.b16 %v643
    %v821 = vunpack.c.l.b16 %v644
    %v822 = vunpack.c.l.b16 %v645
    %v823 = vpack.c.b16 %v820, %v819
    %v824 = vpack.c.b16 %v822, %v821
    %827 = vmatprep.subr.bf16.mxu0 0
    %828 = vmatpush1.bf16.msra.mxu0 %v823
    %829 = vmatprep.subr.bf16.mxu0 0
    %830 = vmatpush1.bf16.msra.mxu0 %v824
    %831 = vmatprep.subr.bf16.mxu0 0
    %832 = vmatpush1.bf16.msra.mxu0 0
    %833 = vmatprep.subr.bf16.mxu0 0
    %834 = vmatpush1.bf16.msra.mxu0 0
    %835 = vmatprep.subr.bf16.mxu0 0
    %836 = vmatpush1.bf16.msra.mxu0 0
    %837 = vmatprep.subr.bf16.mxu0 0
    %838 = vmatpush1.bf16.msra.mxu0 0
    %839 = vmatprep.subr.bf16.mxu0 0
    %840 = vmatpush1.bf16.msra.mxu0 0
    %841 = vmatprep.subr.bf16.mxu0 0
    %842 = vmatpush1.bf16.msra.mxu0 0
    %843 = vmatprep.subr.bf16.mxu0 0
    %844 = vmatpush1.bf16.msra.mxu0 0
    %845 = vmatprep.subr.bf16.mxu0 0
    %846 = vmatpush1.bf16.msra.mxu0 0
    %847 = vmatprep.subr.bf16.mxu0 0
    %848 = vmatpush1.bf16.msra.mxu0 0
    %849 = vmatprep.subr.bf16.mxu0 0
    %850 = vmatpush1.bf16.msra.mxu0 0
    %851 = vmatprep.subr.bf16.mxu0 0
    %852 = vmatpush1.bf16.msra.mxu0 0
    %853 = vmatprep.subr.bf16.mxu0 0
    %854 = vmatpush1.bf16.msra.mxu0 0
    %855 = vmatprep.subr.bf16.mxu0 0
    %856 = vmatpush1.bf16.msra.mxu0 0
    %857 = vmatprep.subr.bf16.mxu0 0
    %858 = vmatpush1.bf16.msra.mxu0 0
    %859 = vmatprep.mubr.bf16.mxu0 0
    %860 = vmatmul.mubr.bf16.gmra.mrb[0].mxu0 %v249
    %v861 = vpop.f32.mrb[0].mxu0
    %v862 = vadd.f32 0.0, %v861
    %v863 = vpop.f32.mrb[0].mxu0
    %v864 = vpop.f32.mrb[0].mxu0
    %v865 = vpop.f32.mrb[0].mxu0
    %866 = vdwg.mxu0
    %v867 = vadd.f32 %v814, %v862
    %v868 = vtanh.pop %v867
    %869 = vst.msk [vmem:[#allocation2] sm:$0x3] %vm225, %v868
    %v870 = vld [vmem:[%s294] sm:$0x3]
    %v871 = vpack.c.bf16 %v868, %v868
    %v873 = vsel %vm247, %v871, 0
    %875 = vmatprep.subr.bf16.mxu0 0
    %876 = vmatpush1.bf16.msra.mxu0 %v823
    %877 = vmatprep.subr.bf16.mxu0 0
    %878 = vmatpush1.bf16.msra.mxu0 %v824
    %879 = vmatprep.subr.bf16.mxu0 0
    %880 = vmatpush1.bf16.msra.mxu0 0
    %881 = vmatprep.subr.bf16.mxu0 0
    %882 = vmatpush1.bf16.msra.mxu0 0
    %883 = vmatprep.subr.bf16.mxu0 0
    %884 = vmatpush1.bf16.msra.mxu0 0
    %885 = vmatprep.subr.bf16.mxu0 0
    %886 = vmatpush1.bf16.msra.mxu0 0
    %887 = vmatprep.subr.bf16.mxu0 0
    %888 = vmatpush1.bf16.msra.mxu0 0
    %889 = vmatprep.subr.bf16.mxu0 0
    %890 = vmatpush1.bf16.msra.mxu0 0
    %891 = vmatprep.subr.bf16.mxu0 0
    %892 = vmatpush1.bf16.msra.mxu0 0
    %893 = vmatprep.subr.bf16.mxu0 0
    %894 = vmatpush1.bf16.msra.mxu0 0
    %895 = vmatprep.subr.bf16.mxu0 0
    %896 = vmatpush1.bf16.msra.mxu0 0
    %897 = vmatprep.subr.bf16.mxu0 0
    %898 = vmatpush1.bf16.msra.mxu0 0
    %899 = vmatprep.subr.bf16.mxu0 0
    %900 = vmatpush1.bf16.msra.mxu0 0
    %901 = vmatprep.subr.bf16.mxu0 0
    %902 = vmatpush1.bf16.msra.mxu0 0
    %903 = vmatprep.subr.bf16.mxu0 0
    %904 = vmatpush1.bf16.msra.mxu0 0
    %905 = vmatprep.subr.bf16.mxu0 0
    %906 = vmatpush1.bf16.msra.mxu0 0
    %907 = vmatprep.mubr.bf16.mxu0 0
    %908 = vmatmul.mubr.bf16.gmra.mrb[0].mxu0 %v873
    %v909 = vpop.f32.mrb[0].mxu0
    %v910 = vadd.f32 0.0, %v909
    %v911 = vpop.f32.mrb[0].mxu0
    %v912 = vpop.f32.mrb[0].mxu0
    %v913 = vpop.f32.mrb[0].mxu0
    %914 = vdwg.mxu0
    %v915 = vadd.f32 %v870, %v910
    %v916 = vtanh.pop %v915
    %917 = vst.msk [vmem:[%s294] sm:$0x3] %vm225, %v916
    %v918 = vld [vmem:[%s343] sm:$0x3]
    %v919 = vpack.c.bf16 %v916, %v916
    %v921 = vsel %vm247, %v919, 0
    %923 = vmatprep.subr.bf16.mxu0 0
    %924 = vmatpush1.bf16.msra.mxu0 %v823
    %925 = vmatprep.subr.bf16.mxu0 0
    %926 = vmatpush1.bf16.msra.mxu0 %v824
    %927 = vmatprep.subr.bf16.mxu0 0
    %928 = vmatpush1.bf16.msra.mxu0 0
    %929 = vmatprep.subr.bf16.mxu0 0
    %930 = vmatpush1.bf16.msra.mxu0 0
    %931 = vmatprep.subr.bf16.mxu0 0
    %932 = vmatpush1.bf16.msra.mxu0 0
    %933 = vmatprep.subr.bf16.mxu0 0
    %934 = vmatpush1.bf16.msra.mxu0 0
    %935 = vmatprep.subr.bf16.mxu0 0
    %936 = vmatpush1.bf16.msra.mxu0 0
    %937 = vmatprep.subr.bf16.mxu0 0
    %938 = vmatpush1.bf16.msra.mxu0 0
    %939 = vmatprep.subr.bf16.mxu0 0
    %940 = vmatpush1.bf16.msra.mxu0 0
    %941 = vmatprep.subr.bf16.mxu0 0
    %942 = vmatpush1.bf16.msra.mxu0 0
    %943 = vmatprep.subr.bf16.mxu0 0
    %944 = vmatpush1.bf16.msra.mxu0 0
    %945 = vmatprep.subr.bf16.mxu0 0
    %946 = vmatpush1.bf16.msra.mxu0 0
    %947 = vmatprep.subr.bf16.mxu0 0
    %948 = vmatpush1.bf16.msra.mxu0 0
    %949 = vmatprep.subr.bf16.mxu0 0
    %950 = vmatpush1.bf16.msra.mxu0 0
    %951 = vmatprep.subr.bf16.mxu0 0
    %952 = vmatpush1.bf16.msra.mxu0 0
    %953 = vmatprep.subr.bf16.mxu0 0
    %954 = vmatpush1.bf16.msra.mxu0 0
    %955 = vmatprep.mubr.bf16.mxu0 0
    %956 = vmatmul.mubr.bf16.gmra.mrb[0].mxu0 %v921
    %v957 = vpop.f32.mrb[0].mxu0
    %v958 = vadd.f32 0.0, %v957
    %v959 = vpop.f32.mrb[0].mxu0
    %v960 = vpop.f32.mrb[0].mxu0
    %v961 = vpop.f32.mrb[0].mxu0
    %962 = vdwg.mxu0
    %v963 = vadd.f32 %v918, %v958
    %v964 = vtanh.pop %v963
    %965 = vst.msk [vmem:[%s343] sm:$0x3] %vm225, %v964
    %v966 = vld [vmem:[%s392] sm:$0x3]
    %v967 = vpack.c.bf16 %v964, %v964
    %v969 = vsel %vm247, %v967, 0
    %971 = vmatprep.subr.bf16.mxu0 0
    %972 = vmatpush1.bf16.msra.mxu0 %v823
    %973 = vmatprep.subr.bf16.mxu0 0
    %974 = vmatpush1.bf16.msra.mxu0 %v824
    %975 = vmatprep.subr.bf16.mxu0 0
    %976 = vmatpush1.bf16.msra.mxu0 0
    %977 = vmatprep.subr.bf16.mxu0 0
    %978 = vmatpush1.bf16.msra.mxu0 0
    %979 = vmatprep.subr.bf16.mxu0 0
    %980 = vmatpush1.bf16.msra.mxu0 0
    %981 = vmatprep.subr.bf16.mxu0 0
    %982 = vmatpush1.bf16.msra.mxu0 0
    %983 = vmatprep.subr.bf16.mxu0 0
    %984 = vmatpush1.bf16.msra.mxu0 0
    %985 = vmatprep.subr.bf16.mxu0 0
    %986 = vmatpush1.bf16.msra.mxu0 0
    %987 = vmatprep.subr.bf16.mxu0 0
    %988 = vmatpush1.bf16.msra.mxu0 0
    %989 = vmatprep.subr.bf16.mxu0 0
    %990 = vmatpush1.bf16.msra.mxu0 0
    %991 = vmatprep.subr.bf16.mxu0 0
    %992 = vmatpush1.bf16.msra.mxu0 0
    %993 = vmatprep.subr.bf16.mxu0 0
    %994 = vmatpush1.bf16.msra.mxu0 0
    %995 = vmatprep.subr.bf16.mxu0 0
    %996 = vmatpush1.bf16.msra.mxu0 0
    %997 = vmatprep.subr.bf16.mxu0 0
    %998 = vmatpush1.bf16.msra.mxu0 0
    %999 = vmatprep.subr.bf16.mxu0 0
    %1000 = vmatpush1.bf16.msra.mxu0 0
    %1001 = vmatprep.subr.bf16.mxu0 0
    %1002 = vmatpush1.bf16.msra.mxu0 0
    %1003 = vmatprep.mubr.bf16.mxu0 0
    %1004 = vmatmul.mubr.bf16.gmra.mrb[0].mxu0 %v969
    %v1005 = vpop.f32.mrb[0].mxu0
    %v1006 = vadd.f32 0.0, %v1005
    %v1007 = vpop.f32.mrb[0].mxu0
    %v1008 = vpop.f32.mrb[0].mxu0
    %v1009 = vpop.f32.mrb[0].mxu0
    %1010 = vdwg.mxu0
    %v1011 = vadd.f32 %v966, %v1006
    %v1012 = vtanh.pop %v1011
    %1013 = vst.msk [vmem:[%s392] sm:$0x3] %vm225, %v1012
    %v1014 = vld [vmem:[%s441] sm:$0x3]
    %v1015 = vpack.c.bf16 %v1012, %v1012
    %v1017 = vsel %vm247, %v1015, 0
    %1019 = vmatprep.subr.bf16.mxu0 0
    %1020 = vmatpush1.bf16.msra.mxu0 %v823
    %1021 = vmatprep.subr.bf16.mxu0 0
    %1022 = vmatpush1.bf16.msra.mxu0 %v824
    %1023 = vmatprep.subr.bf16.mxu0 0
    %1024 = vmatpush1.bf16.msra.mxu0 0
    %1025 = vmatprep.subr.bf16.mxu0 0
    %1026 = vmatpush1.bf16.msra.mxu0 0
    %1027 = vmatprep.subr.bf16.mxu0 0
    %1028 = vmatpush1.bf16.msra.mxu0 0
    %1029 = vmatprep.subr.bf16.mxu0 0
    %1030 = vmatpush1.bf16.msra.mxu0 0
    %1031 = vmatprep.subr.bf16.mxu0 0
    %1032 = vmatpush1.bf16.msra.mxu0 0
    %1033 = vmatprep.subr.bf16.mxu0 0
    %1034 = vmatpush1.bf16.msra.mxu0 0
    %1035 = vmatprep.subr.bf16.mxu0 0
    %1036 = vmatpush1.bf16.msra.mxu0 0
    %1037 = vmatprep.subr.bf16.mxu0 0
    %1038 = vmatpush1.bf16.msra.mxu0 0
    %1039 = vmatprep.subr.bf16.mxu0 0
    %1040 = vmatpush1.bf16.msra.mxu0 0
    %1041 = vmatprep.subr.bf16.mxu0 0
    %1042 = vmatpush1.bf16.msra.mxu0 0
    %1043 = vmatprep.subr.bf16.mxu0 0
    %1044 = vmatpush1.bf16.msra.mxu0 0
    %1045 = vmatprep.subr.bf16.mxu0 0
    %1046 = vmatpush1.bf16.msra.mxu0 0
    %1047 = vmatprep.subr.bf16.mxu0 0
    %1048 = vmatpush1.bf16.msra.mxu0 0
    %1049 = vmatprep.subr.bf16.mxu0 0
    %1050 = vmatpush1.bf16.msra.mxu0 0
    %1051 = vmatprep.mubr.bf16.mxu0 0
    %1052 = vmatmul.mubr.bf16.gmra.mrb[0].mxu0 %v1017
    %v1053 = vpop.f32.mrb[0].mxu0
    %v1054 = vadd.f32 0.0, %v1053
    %v1055 = vpop.f32.mrb[0].mxu0
    %v1056 = vpop.f32.mrb[0].mxu0
    %v1057 = vpop.f32.mrb[0].mxu0
    %1058 = vdwg.mxu0
    %v1059 = vadd.f32 %v1014, %v1054
    %v1060 = vtanh.pop %v1059
    %1061 = vst.msk [vmem:[%s441] sm:$0x3] %vm225, %v1060
    %v1062 = vld [vmem:[%s490] sm:$0x3]
    %v1063 = vpack.c.bf16 %v1060, %v1060
    %v1065 = vsel %vm247, %v1063, 0
    %1067 = vmatprep.subr.bf16.mxu0 0
    %1068 = vmatpush1.bf16.msra.mxu0 %v823
    %1069 = vmatprep.subr.bf16.mxu0 0
    %1070 = vmatpush1.bf16.msra.mxu0 %v824
    %1071 = vmatprep.subr.bf16.mxu0 0
    %1072 = vmatpush1.bf16.msra.mxu0 0
    %1073 = vmatprep.subr.bf16.mxu0 0
    %1074 = vmatpush1.bf16.msra.mxu0 0
    %1075 = vmatprep.subr.bf16.mxu0 0
    %1076 = vmatpush1.bf16.msra.mxu0 0
    %1077 = vmatprep.subr.bf16.mxu0 0
    %1078 = vmatpush1.bf16.msra.mxu0 0
    %1079 = vmatprep.subr.bf16.mxu0 0
    %1080 = vmatpush1.bf16.msra.mxu0 0
    %1081 = vmatprep.subr.bf16.mxu0 0
    %1082 = vmatpush1.bf16.msra.mxu0 0
    %1083 = vmatprep.subr.bf16.mxu0 0
    %1084 = vmatpush1.bf16.msra.mxu0 0
    %1085 = vmatprep.subr.bf16.mxu0 0
    %1086 = vmatpush1.bf16.msra.mxu0 0
    %1087 = vmatprep.subr.bf16.mxu0 0
    %1088 = vmatpush1.bf16.msra.mxu0 0
    %1089 = vmatprep.subr.bf16.mxu0 0
    %1090 = vmatpush1.bf16.msra.mxu0 0
    %1091 = vmatprep.subr.bf16.mxu0 0
    %1092 = vmatpush1.bf16.msra.mxu0 0
    %1093 = vmatprep.subr.bf16.mxu0 0
    %1094 = vmatpush1.bf16.msra.mxu0 0
    %1095 = vmatprep.subr.bf16.mxu0 0
    %1096 = vmatpush1.bf16.msra.mxu0 0
    %1097 = vmatprep.subr.bf16.mxu0 0
    %1098 = vmatpush1.bf16.msra.mxu0 0
    %1099 = vmatprep.mubr.bf16.mxu0 0
    %1100 = vmatmul.mubr.bf16.gmra.mrb[0].mxu0 %v1065
    %v1101 = vpop.f32.mrb[0].mxu0
    %v1102 = vadd.f32 0.0, %v1101
    %v1103 = vpop.f32.mrb[0].mxu0
    %v1104 = vpop.f32.mrb[0].mxu0
    %v1105 = vpop.f32.mrb[0].mxu0
    %1106 = vdwg.mxu0
    %v1107 = vadd.f32 %v1062, %v1102
    %v1108 = vtanh.pop %v1107
    %1109 = vst.msk [vmem:[%s490] sm:$0x3] %vm225, %v1108
    %v1110 = vld [vmem:[%s539] sm:$0x3]
    %v1111 = vpack.c.bf16 %v1108, %v1108
    %v1113 = vsel %vm247, %v1111, 0
    %1115 = vmatprep.subr.bf16.mxu0 0
    %1116 = vmatpush1.bf16.msra.mxu0 %v823
    %1117 = vmatprep.subr.bf16.mxu0 0
    %1118 = vmatpush1.bf16.msra.mxu0 %v824
    %1119 = vmatprep.subr.bf16.mxu0 0
    %1120 = vmatpush1.bf16.msra.mxu0 0
    %1121 = vmatprep.subr.bf16.mxu0 0
    %1122 = vmatpush1.bf16.msra.mxu0 0
    %1123 = vmatprep.subr.bf16.mxu0 0
    %1124 = vmatpush1.bf16.msra.mxu0 0
    %1125 = vmatprep.subr.bf16.mxu0 0
    %1126 = vmatpush1.bf16.msra.mxu0 0
    %1127 = vmatprep.subr.bf16.mxu0 0
    %1128 = vmatpush1.bf16.msra.mxu0 0
    %1129 = vmatprep.subr.bf16.mxu0 0
    %1130 = vmatpush1.bf16.msra.mxu0 0
    %1131 = vmatprep.subr.bf16.mxu0 0
    %1132 = vmatpush1.bf16.msra.mxu0 0
    %1133 = vmatprep.subr.bf16.mxu0 0
    %1134 = vmatpush1.bf16.msra.mxu0 0
    %1135 = vmatprep.subr.bf16.mxu0 0
    %1136 = vmatpush1.bf16.msra.mxu0 0
    %1137 = vmatprep.subr.bf16.mxu0 0
    %1138 = vmatpush1.bf16.msra.mxu0 0
    %1139 = vmatprep.subr.bf16.mxu0 0
    %1140 = vmatpush1.bf16.msra.mxu0 0
    %1141 = vmatprep.subr.bf16.mxu0 0
    %1142 = vmatpush1.bf16.msra.mxu0 0
    %1143 = vmatprep.subr.bf16.mxu0 0
    %1144 = vmatpush1.bf16.msra.mxu0 0
    %1145 = vmatprep.subr.bf16.mxu0 0
    %1146 = vmatpush1.bf16.msra.mxu0 0
    %1147 = vmatprep.mubr.bf16.mxu0 0
    %1148 = vmatmul.mubr.bf16.gmra.mrb[0].mxu0 %v1113
    %v1149 = vpop.f32.mrb[0].mxu0
    %v1150 = vadd.f32 0.0, %v1149
    %v1151 = vpop.f32.mrb[0].mxu0
    %v1152 = vpop.f32.mrb[0].mxu0
    %v1153 = vpop.f32.mrb[0].mxu0
    %1154 = vdwg.mxu0
    %v1155 = vadd.f32 %v1110, %v1150
    %v1156 = vtanh.pop %v1155
    %1157 = vst.msk [vmem:[%s539] sm:$0x3] %vm225, %v1156
    %v1158 = vld [vmem:[%s588] sm:$0x3]
    %v1159 = vpack.c.bf16 %v1156, %v1156
    %v1161 = vsel %vm247, %v1159, 0
    %1163 = vmatprep.subr.bf16.mxu0 0
    %1164 = vmatpush1.bf16.msra.mxu0 %v823
    %1165 = vmatprep.subr.bf16.mxu0 0
    %1166 = vmatpush1.bf16.msra.mxu0 %v824
    %1167 = vmatprep.subr.bf16.mxu0 0
    %1168 = vmatpush1.bf16.msra.mxu0 0
    %1169 = vmatprep.subr.bf16.mxu0 0
    %1170 = vmatpush1.bf16.msra.mxu0 0
    %1171 = vmatprep.subr.bf16.mxu0 0
    %1172 = vmatpush1.bf16.msra.mxu0 0
    %1173 = vmatprep.subr.bf16.mxu0 0
    %1174 = vmatpush1.bf16.msra.mxu0 0
    %1175 = vmatprep.subr.bf16.mxu0 0
    %1176 = vmatpush1.bf16.msra.mxu0 0
    %1177 = vmatprep.subr.bf16.mxu0 0
    %1178 = vmatpush1.bf16.msra.mxu0 0
    %1179 = vmatprep.subr.bf16.mxu0 0
    %1180 = vmatpush1.bf16.msra.mxu0 0
    %1181 = vmatprep.subr.bf16.mxu0 0
    %1182 = vmatpush1.bf16.msra.mxu0 0
    %1183 = vmatprep.subr.bf16.mxu0 0
    %1184 = vmatpush1.bf16.msra.mxu0 0
    %1185 = vmatprep.subr.bf16.mxu0 0
    %1186 = vmatpush1.bf16.msra.mxu0 0
    %1187 = vmatprep.subr.bf16.mxu0 0
    %1188 = vmatpush1.bf16.msra.mxu0 0
    %1189 = vmatprep.subr.bf16.mxu0 0
    %1190 = vmatpush1.bf16.msra.mxu0 0
    %1191 = vmatprep.subr.bf16.mxu0 0
    %1192 = vmatpush1.bf16.msra.mxu0 0
    %1193 = vmatprep.subr.bf16.mxu0 0
    %1194 = vmatpush1.bf16.msra.mxu0 0
    %1195 = vmatprep.mubr.bf16.mxu0 0
    %1196 = vmatmul.mubr.bf16.gmra.mrb[0].mxu0 %v1161
    %v1197 = vpop.f32.mrb[0].mxu0
    %v1198 = vadd.f32 0.0, %v1197
    %v1199 = vpop.f32.mrb[0].mxu0
    %v1200 = vpop.f32.mrb[0].mxu0
    %v1201 = vpop.f32.mrb[0].mxu0
    %1202 = vdwg.mxu0
    %v1203 = vadd.f32 %v1158, %v1198
    %v1204 = vtanh.pop %v1203
    %1205 = vst.msk [vmem:[%s588] sm:$0x3] %vm225, %v1204
    %s1206 = scalar_lea.vmem [#allocation8], 2
    %1207 = vst.msk [vmem:[%s1206] sm:$0x3] %vm225, %v1204
    %v1208 = vld [vmem:[#allocation2] sm:$0x3]
    %v1209 = vld [vmem:[#allocation2 + $0x2] sm:$0x3]
    %v1210 = vld [vmem:[#allocation2 + $0x4] sm:$0x3]
    %v1211 = vld [vmem:[#allocation2 + $0x6] sm:$0x3]
    %v1212 = vld [vmem:[#allocation2 + $0x8] sm:$0x3]
    %v1213 = vld [vmem:[#allocation2 + $0xa] sm:$0x3]
    %v1214 = vld [vmem:[#allocation2 + $0xc] sm:$0x3]
    %v1215 = vld [vmem:[#allocation2 + $0xe] sm:$0x3]
    %v1224 = vcombine.low %v1208, %v1209
    %v1225 = vcombine.low %v1210, %v1211
    %v1227 = vunpack.c.l.s4 1983009808
    %v1228 = vunpack.c.0.s8 %v1227
    %v1229 = vlaneseq
    %v1230 = vshrl.u32 %v1229, 7
    %v1231 = vsub.s32 %v1228, %v1230
    %v1232 = vrot.slane %v1224, %v1231
    %v1234 = vunpack.c.l.s4 1983009808
    %v1235 = vunpack.c.0.s8 %v1234
    %v1236 = vlaneseq
    %v1237 = vshrl.u32 %v1236, 7
    %v1238 = vsub.s32 %v1235, %v1237
    %v1239 = vrot.slane %v1225, %v1238
    %v1240 = vcombine.low %v1232, %v1239
    %v1241 = vcombine.low %v1212, %v1213
    %v1242 = vcombine.low %v1214, %v1215
    %v1244 = vunpack.c.l.s4 1983009808
    %v1245 = vunpack.c.0.s8 %v1244
    %v1246 = vlaneseq
    %v1247 = vshrl.u32 %v1246, 7
    %v1248 = vsub.s32 %v1245, %v1247
    %v1249 = vrot.slane %v1241, %v1248
    %v1251 = vunpack.c.l.s4 1983009808
    %v1252 = vunpack.c.0.s8 %v1251
    %v1253 = vlaneseq
    %v1254 = vshrl.u32 %v1253, 7
    %v1255 = vsub.s32 %v1252, %v1254
    %v1256 = vrot.slane %v1242, %v1255
    %v1257 = vcombine.low %v1249, %v1256
    %v1260 = vpack.c.bf16 %v1257, %v1240
    %v1261 = vld [vmem:[#allocation6] sm:$0xf]
    %v1262 = vld [vmem:[#allocation6 + $0x4] sm:$0xf]
    %v1263 = vld [vmem:[#allocation6 + $0x8] sm:$0xf]
    %v1264 = vld [vmem:[#allocation6 + $0xc] sm:$0xf]
    %v1265 = vld [vmem:[%s8] sm:$0x1]
    %v1267 = vlaneseq
    %v1268 = vshrl.u32 %v1267, 7
    %v1269 = vsub.s32 0, %v1268
    %v1270 = vrot.slane %v1265, %v1269
    %v1276 = vunpack.c.l.b16 %v1261
    %v1277 = vunpack.c.l.b16 %v1262
    %v1278 = vunpack.c.l.b16 %v1263
    %v1279 = vunpack.c.l.b16 %v1264
    %v1280 = vpack.c.b16 %v1277, %v1276
    %v1281 = vpack.c.b16 %v1279, %v1278
    %v1285 = vsel %vm247, %v1260, 0
    %1287 = vmatprep.subr.bf16.mxu0 0
    %1288 = vmatpush1.bf16.msra.mxu0 %v1280
    %1289 = vmatprep.subr.bf16.mxu0 0
    %1290 = vmatpush1.bf16.msra.mxu0 %v1281
    %1291 = vmatprep.subr.bf16.mxu0 0
    %1292 = vmatpush1.bf16.msra.mxu0 0
    %1293 = vmatprep.subr.bf16.mxu0 0
    %1294 = vmatpush1.bf16.msra.mxu0 0
    %1295 = vmatprep.subr.bf16.mxu0 0
    %1296 = vmatpush1.bf16.msra.mxu0 0
    %1297 = vmatprep.subr.bf16.mxu0 0
    %1298 = vmatpush1.bf16.msra.mxu0 0
    %1299 = vmatprep.subr.bf16.mxu0 0
    %1300 = vmatpush1.bf16.msra.mxu0 0
    %1301 = vmatprep.subr.bf16.mxu0 0
    %1302 = vmatpush1.bf16.msra.mxu0 0
    %1303 = vmatprep.subr.bf16.mxu0 0
    %1304 = vmatpush1.bf16.msra.mxu0 0
    %1305 = vmatprep.subr.bf16.mxu0 0
    %1306 = vmatpush1.bf16.msra.mxu0 0
    %1307 = vmatprep.subr.bf16.mxu0 0
    %1308 = vmatpush1.bf16.msra.mxu0 0
    %1309 = vmatprep.subr.bf16.mxu0 0
    %1310 = vmatpush1.bf16.msra.mxu0 0
    %1311 = vmatprep.subr.bf16.mxu0 0
    %1312 = vmatpush1.bf16.msra.mxu0 0
    %1313 = vmatprep.subr.bf16.mxu0 0
    %1314 = vmatpush1.bf16.msra.mxu0 0
    %1315 = vmatprep.subr.bf16.mxu0 0
    %1316 = vmatpush1.bf16.msra.mxu0 0
    %1317 = vmatprep.subr.bf16.mxu0 0
    %1318 = vmatpush1.bf16.msra.mxu0 0
    %1319 = vmatprep.mubr.bf16.mxu0 0
    %1320 = vmatmul.mubr.bf16.gmra.mrb[0].mxu0 %v1285
    %v1321 = vpop.f32.mrb[0].mxu0
    %v1322 = vadd.f32 %v1270, %v1321
    %v1323 = vpop.f32.mrb[0].mxu0
    %v1324 = vpop.f32.mrb[0].mxu0
    %v1325 = vadd.f32 %v1270, %v1324
    %v1326 = vpop.f32.mrb[0].mxu0
    %1327 = vdwg.mxu0
    %v1330 = vcombine.high %v1322, %v1322
    %v1332 = vunpack.c.l.s4 1983009808
    %v1333 = vunpack.c.0.s8 %v1332
    %v1334 = vlaneseq
    %v1335 = vshrl.u32 %v1334, 7
    %v1336 = vsub.s32 %v1333, %v1335
    %v1337 = vrot.slane %v1322, %v1336
    %v1339 = vunpack.c.l.s4 1983009808
    %v1340 = vunpack.c.0.s8 %v1339
    %v1341 = vlaneseq
    %v1342 = vshrl.u32 %v1341, 7
    %v1343 = vsub.s32 %v1340, %v1342
    %v1344 = vrot.slane %v1330, %v1343
    %v1345 = vcombine.high %v1337, %v1337
    %v1346 = vcombine.high %v1344, %v1344
    %v1347 = vcombine.high %v1325, %v1325
    %v1349 = vunpack.c.l.s4 1983009808
    %v1350 = vunpack.c.0.s8 %v1349
    %v1351 = vlaneseq
    %v1352 = vshrl.u32 %v1351, 7
    %v1353 = vsub.s32 %v1350, %v1352
    %v1354 = vrot.slane %v1325, %v1353
    %v1356 = vunpack.c.l.s4 1983009808
    %v1357 = vunpack.c.0.s8 %v1356
    %v1358 = vlaneseq
    %v1359 = vshrl.u32 %v1358, 7
    %v1360 = vsub.s32 %v1357, %v1359
    %v1361 = vrot.slane %v1347, %v1360
    %v1362 = vcombine.high %v1354, %v1354
    %v1363 = vcombine.high %v1361, %v1361
    %1372 = vst [vmem:[%s9] sm:$0x3] %v1337
    %1373 = vst [vmem:[%s9 + $0x2] sm:$0x3] %v1345
    %1374 = vst [vmem:[%s9 + $0x4] sm:$0x3] %v1344
    %1375 = vst [vmem:[%s9 + $0x6] sm:$0x3] %v1346
    %1376 = vst [vmem:[%s9 + $0x8] sm:$0x3] %v1354
    %1377 = vst [vmem:[%s9 + $0xa] sm:$0x3] %v1362
    %1378 = vst [vmem:[%s9 + $0xc] sm:$0x3] %v1361
    %1379 = vst [vmem:[%s9 + $0xe] sm:$0x3] %v1363
    // Predicated region
    $region46: #{model_forward.1} parent=1 // pred_check
      _
    $region47: #{model_forward.1} parent=1 // pred_check_branch
      %1381 = sbr.rel (0) target = $region49
    $region48: #{model_forward.1} parent=1 // pred_region
      _
    $region49: #{model_forward.1} parent=1 // pred_fallthru
      _
    // Predicated region
    $region50: #{model_forward.1} parent=1 // pred_check
      _
    $region51: #{model_forward.1} parent=1 // pred_check_branch
      %1383 = sbr.rel (0) target = $region53
    $region52: #{model_forward.1} parent=1 // pred_region
      %s1385 = ssub.s32 64, 64
      %1386 = vsyncadd [#allocation5], %s1385
      %s1387 = sshll.u32 [#allocation8], 4
      %s1388 = int_to_ptr.vmem [resolvable:$true] %s1387
      %1393 = dma.vmem_to_hbm [thread:$0]  %s1388, 64, %s10, [#allocation5], 32, 32, 2
    $region53: #{model_forward.1} parent=1 // pred_fallthru
      _
    // Predicated region
    $region54: #{model_forward.1} parent=1 // pred_check
      _
    $region55: #{model_forward.1} parent=1 // pred_check_branch
      %1395 = sbr.rel (0) target = $region57
    $region56: #{model_forward.1} parent=1 // pred_region
      _
    $region57: #{model_forward.1} parent=1 // pred_fallthru
      _
    // Predicated region
    $region58: #{model_forward.1} parent=1 // pred_check
      _
    $region59: #{model_forward.1} parent=1 // pred_check_branch
      %1397 = sbr.rel (0) target = $region61
    $region60: #{model_forward.1} parent=1 // pred_region
      %1398 = dma.done [#allocation5], 64
    $region61: #{model_forward.1} parent=1 // pred_fallthru
      _
    %1399 = vsyncpa [#allocation4], 1
    %1400 = vsyncpa [#allocation7], 1
    %1401 = vsyncpa [#allocation5], 1

</llo_original>
